<compile_context>
chip_gen: v7x
topology: tpu7x:2x2x1
jax: 0.10.0
libtpu: 0.0.40
codegen_flags: <defaults>
</compile_context>

<pallas_src>
import jax
import jax.numpy as jnp
from jax import lax
from jax.experimental import pallas as pl
from jax.experimental.pallas import tpu as pltpu


# ----------------------------------------------------------------------------
# Hardware-aware configuration helpers
# ----------------------------------------------------------------------------
def _tpu_generation():
    """Coarse TPU generation tag used for block-size / VMEM-budget decisions."""
    try:
        dev = jax.devices()[0]
        if dev.platform != "tpu":
            return "not_tpu"
        kind = dev.device_kind.lower()
    except Exception:
        return "not_tpu"
    if "v7" in kind:
        return "v7x"
    if "v6" in kind:
        return "v6e"
    if "v5" in kind and ("lite" in kind or "v5e" in kind):
        return "v5e"
    return "other"


def _choose_block_batch(N, L, H, gen):
    """Batch elements processed per grid step.

    v7x shards the 'parallel' grid axis across two TensorCores, so keep >= 2
    (preferably an even number of) grid steps there; single-core v6e/v5e only
    pay ~0.35us per extra step, so bigger blocks are allowed.  NB*H also caps
    the trace-time unroll of the per-head loop.
    """
    row_cap = 256 if gen in ("v7x", "other", "not_tpu") else 1024
    need_multi_step = gen in ("v7x", "other") and N >= 2
    cands = []
    for nb in range(1, N + 1):
        if N % nb:
            continue
        if nb * L > row_cap or nb * H > 64:
            continue
        if need_multi_step and (N // nb) < 2:
            continue
        cands.append(nb)
    if not cands:
        return 1
    if gen == "v7x":
        even = [nb for nb in cands if (N // nb) % 2 == 0]
        if even:
            cands = even
    return max(cands)


def _vmem_limit_bytes(gen, NB, E, L, H, wbytes, o_bytes):
    blk = NB * E * L * 4                                    # one x / out block
    weights = (3 * E * E + E * E) * wbytes + 4 * E * 4      # resident operands
    tmp = 3 * E * L * 4 + 2 * L * L * 4 + E * L * o_bytes + E * L * 4
    need = 2 * (2 * blk) + 2 * weights + tmp                # dbl-buffered blocks
    cap_mib = {"v7x": 52, "v6e": 100, "v5e": 100}.get(gen, 48)
    return int(min(cap_mib << 20, max(32 << 20, 4 * need)))


# ----------------------------------------------------------------------------
# Kernel
# ----------------------------------------------------------------------------
def _make_mha_kernel(NB, L, E, H, mm_dtype):
    D = E // H

    def kernel(x_ref, w_in_ref, b_in_ref, w_out_ref, b_out_ref, out_ref, o_scr):
        w_in = w_in_ref[...]       # (3E, E)  mm_dtype, resident, q rows pre-scaled
        w_out = w_out_ref[...]     # (E, E)   mm_dtype, resident
        b_in = b_in_ref[...]       # (3E, 1)  f32
        b_out = b_out_ref[...]     # (E, 1)   f32

        for b in range(NB):        # NB is small; unrolled at trace time
            xb = x_ref[b].astype(mm_dtype)                        # (E, L) native layout
            # in-projection (feature-major): qkv^T = W_in @ x_b + b_in
            qkv = jnp.dot(w_in, xb,
                          preferred_element_type=jnp.float32) + b_in   # (3E, L) f32

            # Per-head attention.  Head slices are aligned sublane ranges of the
            # (3E, L) projection; head outputs land back in o_scr at sublane
            # offsets with full lane width (no masked lane stores).
            for h in range(H):
                r = h * D
                qh = qkv[r:r + D, :].astype(mm_dtype)              # (D, L)
                kh = qkv[E + r:E + r + D, :].astype(mm_dtype)      # (D, L)
                vh = qkv[2 * E + r:2 * E + r + D, :].astype(mm_dtype)
                # s[l, m] = sum_d q^T[d, l] * k^T[d, m]   (lhs-transposed matmul)
                s = lax.dot_general(qh, kh, (((0,), (0,)), ((), ())),
                                    preferred_element_type=jnp.float32)  # (L, L)
                s = s - jnp.max(s, axis=-1, keepdims=True)
                p = jnp.exp(s)
                p = p * pl.reciprocal(jnp.sum(p, axis=-1, keepdims=True),
                                      approx=True)
                # o^T[d, l] = sum_m v^T[d, m] * p[l, m]   (rhs-transposed matmul)
                oh = lax.dot_general(vh, p.astype(mm_dtype),
                                     (((1,), (1,)), ((), ())),
                                     preferred_element_type=jnp.float32)  # (D, L)
                o_scr[r:r + D, :] = oh.astype(o_scr.dtype)

            # out-projection (feature-major): out^T = W_out @ o^T + b_out
            outb = jnp.dot(w_out, o_scr[...].astype(mm_dtype),
                           preferred_element_type=jnp.float32) + b_out    # (E, L)
            out_ref[b] = outb.astype(out_ref.dtype)

    return kernel


# ----------------------------------------------------------------------------
# Wrapper
# ----------------------------------------------------------------------------
def sim_attention_forward(x_nel, w_in, b_in, w_out, b_out, n_head):
    """x_nel: (N, E, L) float32.  Returns (N, E, L), matching SimAttention."""
    N, E, L = x_nel.shape
    H = n_head
    assert E % H == 0, "embed_dim must be divisible by num_heads"
    D = E // H

    gen = _tpu_generation()
    mm_dtype = jnp.float32 if gen == "not_tpu" else jnp.bfloat16
    wbytes = jnp.dtype(mm_dtype).itemsize
    # Head-output scratch dtype: bf16 halves scratch traffic, but only when the
    # per-head sublane writes stay tile-aligned (16 packed rows for bf16).
    o_dtype = mm_dtype if (mm_dtype == jnp.float32 or D % 16 == 0) else jnp.float32
    o_bytes = jnp.dtype(o_dtype).itemsize

    NB = _choose_block_batch(N, L, H, gen)
    G = N // NB

    # One-time constant prep: fold 1/sqrt(D) into the q rows of the
    # in-projection, cast MXU operands to the matmul dtype, and view the biases
    # as column vectors (feature-major orientation -> weights used as stored
    # by PyTorch, no transposes at all).
    scale = 1.0 / (D ** 0.5)
    w_in_c = jnp.asarray(w_in, jnp.float32).at[:E, :].multiply(scale).astype(mm_dtype)
    b_in_c = jnp.asarray(b_in, jnp.float32).at[:E].multiply(scale).reshape(3 * E, 1)
    w_out_c = jnp.asarray(w_out).astype(mm_dtype)
    b_out_c = jnp.asarray(b_out, jnp.float32).reshape(E, 1)

    flops = 2 * N * L * (3 * E * E + E * E) + 4 * N * H * L * L * D
    bytes_accessed = 2 * N * E * L * 4 + (3 * E * E + E * E) * wbytes + 4 * E * 4
    cost = pl.CostEstimate(flops=int(flops),
                           transcendentals=int(N * H * L * L),
                           bytes_accessed=int(bytes_accessed))

    kernel = _make_mha_kernel(NB, L, E, H, mm_dtype)

    out = pl.pallas_call(
        kernel,
        out_shape=jax.ShapeDtypeStruct((N, E, L), x_nel.dtype),
        grid=(G,),
        in_specs=[
            # x in its native (N, E, L) layout -- only the batch dim is tiled.
            pl.BlockSpec((NB, E, L), lambda g: (g, 0, 0)),
            # Resident operands: constant index maps -> fetched once, no
            # re-DMA across grid steps.
            pl.BlockSpec((3 * E, E), lambda g: (0, 0)),      # W_in (q rows scaled)
            pl.BlockSpec((3 * E, 1), lambda g: (0, 0)),      # b_in (q rows scaled)
            pl.BlockSpec((E, E), lambda g: (0, 0)),          # W_out
            pl.BlockSpec((E, 1), lambda g: (0, 0)),          # b_out
        ],
        out_specs=pl.BlockSpec((NB, E, L), lambda g: (g, 0, 0)),
        scratch_shapes=[pltpu.VMEM((E, L), o_dtype)],        # per-head outputs
        compiler_params=pltpu.CompilerParams(
            dimension_semantics=("parallel",),
            vmem_limit_bytes=_vmem_limit_bytes(gen, NB, E, L, H, wbytes, o_bytes)),
        cost_estimate=cost,
    )(x_nel, w_in_c, b_in_c, w_out_c, b_out_c)
    return out


# ----------------------------------------------------------------------------
# Pure-JAX reference (mirrors torch.nn.MultiheadAttention self-attention)
# ----------------------------------------------------------------------------
def reference_forward(x_nel, w_in, b_in, w_out, b_out, n_head):
    x = jnp.transpose(x_nel, (2, 0, 1))                      # (L, N, E)
    L, N, E = x.shape
    D = E // n_head
    qkv = x @ w_in.T + b_in                                  # (L, N, 3E)
    q, k, v = qkv[..., :E], qkv[..., E:2 * E], qkv[..., 2 * E:]
    q = q * (1.0 / (D ** 0.5))

    def split(t):  # (L,N,E) -> (N,H,L,D)
        return jnp.transpose(t.reshape(L, N, n_head, D), (1, 2, 0, 3))

    q, k, v = split(q), split(k), split(v)
    s = jnp.einsum('nhld,nhmd->nhlm', q, k)
    p = jax.nn.softmax(s, axis=-1)
    o = jnp.einsum('nhlm,nhmd->nhld', p, v)
    o = jnp.transpose(o, (2, 0, 1, 3)).reshape(L, N, E)
    out = o @ w_out.T + b_out                                # (L, N, E)
    return jnp.transpose(out, (1, 2, 0))                     # (N, E, L)


if __name__ == "__main__":
    N, E, L, n_head = 2, 32, 8, 4                            # E % n_head == 0

    key = jax.random.PRNGKey(0)
    k1, k2, k3, k4, k5 = jax.random.split(key, 5)
    w_in = jax.random.uniform(k1, (3 * E, E), jnp.float32, -0.1, 0.1)
    b_in = jax.random.uniform(k2, (3 * E,), jnp.float32, -0.1, 0.1)
    w_out = jax.random.uniform(k3, (E, E), jnp.float32, -0.1, 0.1)
    b_out = jax.random.uniform(k4, (E,), jnp.float32, -0.1, 0.1)
    x = jax.random.normal(k5, (N, E, L), jnp.float32)

    out = sim_attention_forward(x, w_in, b_in, w_out, b_out, n_head)
    out = jax.block_until_ready(out)

    ref_out = reference_forward(x, w_in, b_in, w_out, b_out, n_head)
    assert out.shape == (N, E, L)
    # Tolerance covers bf16 MXU operands and the approx softmax reciprocal.
    tol = 2e-2
    err = float(jnp.max(jnp.abs(out - ref_out)))
    assert jnp.allclose(out, ref_out, atol=tol, rtol=tol), f"max abs err {err}"
    print("KERNEL_OK")
</pallas_src>

<mosaic_0001>
module attributes {stable_mosaic.version = 11 : i64} {
  func.func @kernel(%arg0: i32, %arg1: memref<2x32x8xf32, #tpu.memory_space<vmem>>, %arg2: memref<96x32xf32, #tpu.memory_space<vmem>>, %arg3: memref<96x1xf32, #tpu.memory_space<vmem>>, %arg4: memref<32x32xf32, #tpu.memory_space<vmem>>, %arg5: memref<32x1xf32, #tpu.memory_space<vmem>>, %arg6: memref<2x32x8xf32, #tpu.memory_space<vmem>>, %arg7: memref<32x8xf32, #tpu.memory_space<vmem>>) attributes {dimension_semantics = [#tpu.dimension_semantics<parallel>], iteration_bounds = array<i64: 1>, scalar_prefetch = 0 : i64, scratch_operands = 1 : i64, tpu.core_type = #tpu.core_type<tc>, window_params = [{transform_indices = @transform_0, window_bounds = array<i64: 2, 32, 8>}, {pipeline_mode = #tpu.pipeline_mode<synchronous>, transform_indices = @transform_1, window_bounds = array<i64: 96, 32>}, {pipeline_mode = #tpu.pipeline_mode<synchronous>, transform_indices = @transform_2, window_bounds = array<i64: 96, 1>}, {pipeline_mode = #tpu.pipeline_mode<synchronous>, transform_indices = @transform_3, window_bounds = array<i64: 32, 32>}, {pipeline_mode = #tpu.pipeline_mode<synchronous>, transform_indices = @transform_4, window_bounds = array<i64: 32, 1>}, {transform_indices = @transform_5, window_bounds = array<i64: 2, 32, 8>}]} {
    %c0 = arith.constant 0 : index
    %c0_0 = arith.constant 0 : index
    %0 = vector.load %arg2[%c0, %c0_0] : memref<96x32xf32, #tpu.memory_space<vmem>>, vector<96x32xf32>
    %c0_1 = arith.constant 0 : index
    %c0_2 = arith.constant 0 : index
    %1 = vector.load %arg4[%c0_1, %c0_2] : memref<32x32xf32, #tpu.memory_space<vmem>>, vector<32x32xf32>
    %c0_3 = arith.constant 0 : index
    %c0_4 = arith.constant 0 : index
    %2 = vector.load %arg3[%c0_3, %c0_4] : memref<96x1xf32, #tpu.memory_space<vmem>>, vector<96x1xf32>
    %c0_5 = arith.constant 0 : index
    %c0_6 = arith.constant 0 : index
    %3 = vector.load %arg5[%c0_5, %c0_6] : memref<32x1xf32, #tpu.memory_space<vmem>>, vector<32x1xf32>
    %c0_7 = arith.constant 0 : index
    %c0_8 = arith.constant 0 : index
    %c0_9 = arith.constant 0 : index
    %4 = vector.load %arg1[%c0_7, %c0_8, %c0_9] : memref<2x32x8xf32, #tpu.memory_space<vmem>>, vector<1x32x8xf32>
    %5 = vector.shape_cast %4 : vector<1x32x8xf32> to vector<32x8xf32>
    %cst = arith.constant dense<0.000000e+00> : vector<96x8xf32>
    %6 = tpu.matmul %0, %5, %cst {dimension_numbers = #tpu.dot_dimension_numbers<[1], [0], [0], [1], [0, 0, 1, 1], [], []>} : vector<96x32xf32>, vector<32x8xf32>, vector<96x8xf32> -> vector<96x8xf32>
    %7 = vector.broadcast %2 : vector<96x1xf32> to vector<96x8xf32>
    %8 = arith.addf %6, %7 : vector<96x8xf32>
    %9 = vector.extract_strided_slice %8 {offsets = [0, 0], sizes = [8, 8], strides = [1, 1]} : vector<96x8xf32> to vector<8x8xf32>
    %10 = vector.extract_strided_slice %8 {offsets = [32, 0], sizes = [8, 8], strides = [1, 1]} : vector<96x8xf32> to vector<8x8xf32>
    %11 = vector.extract_strided_slice %8 {offsets = [64, 0], sizes = [8, 8], strides = [1, 1]} : vector<96x8xf32> to vector<8x8xf32>
    %cst_10 = arith.constant dense<0.000000e+00> : vector<8x8xf32>
    %12 = tpu.matmul %9, %10, %cst_10 {dimension_numbers = #tpu.dot_dimension_numbers<[0], [0], [1], [1], [0, 1, 1, 1], [], []>} : vector<8x8xf32>, vector<8x8xf32>, vector<8x8xf32> -> vector<8x8xf32>
    %cst_11 = arith.constant dense<0xFF800000> : vector<8xf32>
    %13 = vector.multi_reduction <maximumf>, %12, %cst_11 [1] : vector<8x8xf32> to vector<8xf32>
    %14 = vector.shape_cast %13 : vector<8xf32> to vector<8x1xf32>
    %15 = vector.broadcast %14 : vector<8x1xf32> to vector<8x8xf32>
    %16 = arith.subf %12, %15 : vector<8x8xf32>
    %17 = math.exp %16 : vector<8x8xf32>
    %cst_12 = arith.constant dense<0.000000e+00> : vector<8xf32>
    %18 = vector.multi_reduction <add>, %17, %cst_12 [1] : vector<8x8xf32> to vector<8xf32>
    %19 = vector.shape_cast %18 : vector<8xf32> to vector<8x1xf32>
    %20 = tpu.reciprocal %19 {approx = true} : vector<8x1xf32> -> vector<8x1xf32>
    %21 = vector.broadcast %20 : vector<8x1xf32> to vector<8x8xf32>
    %22 = arith.mulf %17, %21 : vector<8x8xf32>
    %cst_13 = arith.constant dense<0.000000e+00> : vector<8x8xf32>
    %23 = tpu.matmul %11, %22, %cst_13 {dimension_numbers = #tpu.dot_dimension_numbers<[1], [1], [0], [0], [0, 0, 1, 0], [], []>} : vector<8x8xf32>, vector<8x8xf32>, vector<8x8xf32> -> vector<8x8xf32>
    %c0_14 = arith.constant 0 : index
    %c0_15 = arith.constant 0 : index
    %24 = vector.load %arg7[%c0_14, %c0_15] : memref<32x8xf32, #tpu.memory_space<vmem>>, vector<8x8xf32>
    tpu.vector_store %arg7[%c0_14, %c0_15], %23 {strides = array<i32>} : memref<32x8xf32, #tpu.memory_space<vmem>>, vector<8x8xf32>,
    %25 = vector.extract_strided_slice %8 {offsets = [8, 0], sizes = [8, 8], strides = [1, 1]} : vector<96x8xf32> to vector<8x8xf32>
    %26 = vector.extract_strided_slice %8 {offsets = [40, 0], sizes = [8, 8], strides = [1, 1]} : vector<96x8xf32> to vector<8x8xf32>
    %27 = vector.extract_strided_slice %8 {offsets = [72, 0], sizes = [8, 8], strides = [1, 1]} : vector<96x8xf32> to vector<8x8xf32>
    %cst_16 = arith.constant dense<0.000000e+00> : vector<8x8xf32>
    %28 = tpu.matmul %25, %26, %cst_16 {dimension_numbers = #tpu.dot_dimension_numbers<[0], [0], [1], [1], [0, 1, 1, 1], [], []>} : vector<8x8xf32>, vector<8x8xf32>, vector<8x8xf32> -> vector<8x8xf32>
    %cst_17 = arith.constant dense<0xFF800000> : vector<8xf32>
    %29 = vector.multi_reduction <maximumf>, %28, %cst_17 [1] : vector<8x8xf32> to vector<8xf32>
    %30 = vector.shape_cast %29 : vector<8xf32> to vector<8x1xf32>
    %31 = vector.broadcast %30 : vector<8x1xf32> to vector<8x8xf32>
    %32 = arith.subf %28, %31 : vector<8x8xf32>
    %33 = math.exp %32 : vector<8x8xf32>
    %cst_18 = arith.constant dense<0.000000e+00> : vector<8xf32>
    %34 = vector.multi_reduction <add>, %33, %cst_18 [1] : vector<8x8xf32> to vector<8xf32>
    %35 = vector.shape_cast %34 : vector<8xf32> to vector<8x1xf32>
    %36 = tpu.reciprocal %35 {approx = true} : vector<8x1xf32> -> vector<8x1xf32>
    %37 = vector.broadcast %36 : vector<8x1xf32> to vector<8x8xf32>
    %38 = arith.mulf %33, %37 : vector<8x8xf32>
    %cst_19 = arith.constant dense<0.000000e+00> : vector<8x8xf32>
    %39 = tpu.matmul %27, %38, %cst_19 {dimension_numbers = #tpu.dot_dimension_numbers<[1], [1], [0], [0], [0, 0, 1, 0], [], []>} : vector<8x8xf32>, vector<8x8xf32>, vector<8x8xf32> -> vector<8x8xf32>
    %c8 = arith.constant 8 : index
    %c0_20 = arith.constant 0 : index
    %40 = vector.load %arg7[%c8, %c0_20] : memref<32x8xf32, #tpu.memory_space<vmem>>, vector<8x8xf32>
    tpu.vector_store %arg7[%c8, %c0_20], %39 {strides = array<i32>} : memref<32x8xf32, #tpu.memory_space<vmem>>, vector<8x8xf32>,
    %41 = vector.extract_strided_slice %8 {offsets = [16, 0], sizes = [8, 8], strides = [1, 1]} : vector<96x8xf32> to vector<8x8xf32>
    %42 = vector.extract_strided_slice %8 {offsets = [48, 0], sizes = [8, 8], strides = [1, 1]} : vector<96x8xf32> to vector<8x8xf32>
    %43 = vector.extract_strided_slice %8 {offsets = [80, 0], sizes = [8, 8], strides = [1, 1]} : vector<96x8xf32> to vector<8x8xf32>
    %cst_21 = arith.constant dense<0.000000e+00> : vector<8x8xf32>
    %44 = tpu.matmul %41, %42, %cst_21 {dimension_numbers = #tpu.dot_dimension_numbers<[0], [0], [1], [1], [0, 1, 1, 1], [], []>} : vector<8x8xf32>, vector<8x8xf32>, vector<8x8xf32> -> vector<8x8xf32>
    %cst_22 = arith.constant dense<0xFF800000> : vector<8xf32>
    %45 = vector.multi_reduction <maximumf>, %44, %cst_22 [1] : vector<8x8xf32> to vector<8xf32>
    %46 = vector.shape_cast %45 : vector<8xf32> to vector<8x1xf32>
    %47 = vector.broadcast %46 : vector<8x1xf32> to vector<8x8xf32>
    %48 = arith.subf %44, %47 : vector<8x8xf32>
    %49 = math.exp %48 : vector<8x8xf32>
    %cst_23 = arith.constant dense<0.000000e+00> : vector<8xf32>
    %50 = vector.multi_reduction <add>, %49, %cst_23 [1] : vector<8x8xf32> to vector<8xf32>
    %51 = vector.shape_cast %50 : vector<8xf32> to vector<8x1xf32>
    %52 = tpu.reciprocal %51 {approx = true} : vector<8x1xf32> -> vector<8x1xf32>
    %53 = vector.broadcast %52 : vector<8x1xf32> to vector<8x8xf32>
    %54 = arith.mulf %49, %53 : vector<8x8xf32>
    %cst_24 = arith.constant dense<0.000000e+00> : vector<8x8xf32>
    %55 = tpu.matmul %43, %54, %cst_24 {dimension_numbers = #tpu.dot_dimension_numbers<[1], [1], [0], [0], [0, 0, 1, 0], [], []>} : vector<8x8xf32>, vector<8x8xf32>, vector<8x8xf32> -> vector<8x8xf32>
    %c16 = arith.constant 16 : index
    %c0_25 = arith.constant 0 : index
    %56 = vector.load %arg7[%c16, %c0_25] : memref<32x8xf32, #tpu.memory_space<vmem>>, vector<8x8xf32>
    tpu.vector_store %arg7[%c16, %c0_25], %55 {strides = array<i32>} : memref<32x8xf32, #tpu.memory_space<vmem>>, vector<8x8xf32>,
    %57 = vector.extract_strided_slice %8 {offsets = [24, 0], sizes = [8, 8], strides = [1, 1]} : vector<96x8xf32> to vector<8x8xf32>
    %58 = vector.extract_strided_slice %8 {offsets = [56, 0], sizes = [8, 8], strides = [1, 1]} : vector<96x8xf32> to vector<8x8xf32>
    %59 = vector.extract_strided_slice %8 {offsets = [88, 0], sizes = [8, 8], strides = [1, 1]} : vector<96x8xf32> to vector<8x8xf32>
    %cst_26 = arith.constant dense<0.000000e+00> : vector<8x8xf32>
    %60 = tpu.matmul %57, %58, %cst_26 {dimension_numbers = #tpu.dot_dimension_numbers<[0], [0], [1], [1], [0, 1, 1, 1], [], []>} : vector<8x8xf32>, vector<8x8xf32>, vector<8x8xf32> -> vector<8x8xf32>
    %cst_27 = arith.constant dense<0xFF800000> : vector<8xf32>
    %61 = vector.multi_reduction <maximumf>, %60, %cst_27 [1] : vector<8x8xf32> to vector<8xf32>
    %62 = vector.shape_cast %61 : vector<8xf32> to vector<8x1xf32>
    %63 = vector.broadcast %62 : vector<8x1xf32> to vector<8x8xf32>
    %64 = arith.subf %60, %63 : vector<8x8xf32>
    %65 = math.exp %64 : vector<8x8xf32>
    %cst_28 = arith.constant dense<0.000000e+00> : vector<8xf32>
    %66 = vector.multi_reduction <add>, %65, %cst_28 [1] : vector<8x8xf32> to vector<8xf32>
    %67 = vector.shape_cast %66 : vector<8xf32> to vector<8x1xf32>
    %68 = tpu.reciprocal %67 {approx = true} : vector<8x1xf32> -> vector<8x1xf32>
    %69 = vector.broadcast %68 : vector<8x1xf32> to vector<8x8xf32>
    %70 = arith.mulf %65, %69 : vector<8x8xf32>
    %cst_29 = arith.constant dense<0.000000e+00> : vector<8x8xf32>
    %71 = tpu.matmul %59, %70, %cst_29 {dimension_numbers = #tpu.dot_dimension_numbers<[1], [1], [0], [0], [0, 0, 1, 0], [], []>} : vector<8x8xf32>, vector<8x8xf32>, vector<8x8xf32> -> vector<8x8xf32>
    %c24 = arith.constant 24 : index
    %c0_30 = arith.constant 0 : index
    %72 = vector.load %arg7[%c24, %c0_30] : memref<32x8xf32, #tpu.memory_space<vmem>>, vector<8x8xf32>
    tpu.vector_store %arg7[%c24, %c0_30], %71 {strides = array<i32>} : memref<32x8xf32, #tpu.memory_space<vmem>>, vector<8x8xf32>,
    %c0_31 = arith.constant 0 : index
    %c0_32 = arith.constant 0 : index
    %73 = vector.load %arg7[%c0_31, %c0_32] : memref<32x8xf32, #tpu.memory_space<vmem>>, vector<32x8xf32>
    %cst_33 = arith.constant dense<0.000000e+00> : vector<32x8xf32>
    %74 = tpu.matmul %1, %73, %cst_33 {dimension_numbers = #tpu.dot_dimension_numbers<[1], [0], [0], [1], [0, 0, 1, 1], [], []>} : vector<32x32xf32>, vector<32x8xf32>, vector<32x8xf32> -> vector<32x8xf32>
    %75 = vector.broadcast %3 : vector<32x1xf32> to vector<32x8xf32>
    %76 = arith.addf %74, %75 : vector<32x8xf32>
    %c0_34 = arith.constant 0 : index
    %c0_35 = arith.constant 0 : index
    %c0_36 = arith.constant 0 : index
    %77 = vector.load %arg6[%c0_34, %c0_35, %c0_36] : memref<2x32x8xf32, #tpu.memory_space<vmem>>, vector<1x32x8xf32>
    %78 = vector.shape_cast %77 : vector<1x32x8xf32> to vector<32x8xf32>
    %79 = vector.shape_cast %76 : vector<32x8xf32> to vector<1x32x8xf32>
    tpu.vector_store %arg6[%c0_34, %c0_35, %c0_36], %79 {strides = array<i32>} : memref<2x32x8xf32, #tpu.memory_space<vmem>>, vector<1x32x8xf32>,
    %c1 = arith.constant 1 : index
    %c0_37 = arith.constant 0 : index
    %c0_38 = arith.constant 0 : index
    %80 = vector.load %arg1[%c1, %c0_37, %c0_38] : memref<2x32x8xf32, #tpu.memory_space<vmem>>, vector<1x32x8xf32>
    %81 = vector.shape_cast %80 : vector<1x32x8xf32> to vector<32x8xf32>
    %cst_39 = arith.constant dense<0.000000e+00> : vector<96x8xf32>
    %82 = tpu.matmul %0, %81, %cst_39 {dimension_numbers = #tpu.dot_dimension_numbers<[1], [0], [0], [1], [0, 0, 1, 1], [], []>} : vector<96x32xf32>, vector<32x8xf32>, vector<96x8xf32> -> vector<96x8xf32>
    %83 = vector.broadcast %2 : vector<96x1xf32> to vector<96x8xf32>
    %84 = arith.addf %82, %83 : vector<96x8xf32>
    %85 = vector.extract_strided_slice %84 {offsets = [0, 0], sizes = [8, 8], strides = [1, 1]} : vector<96x8xf32> to vector<8x8xf32>
    %86 = vector.extract_strided_slice %84 {offsets = [32, 0], sizes = [8, 8], strides = [1, 1]} : vector<96x8xf32> to vector<8x8xf32>
    %87 = vector.extract_strided_slice %84 {offsets = [64, 0], sizes = [8, 8], strides = [1, 1]} : vector<96x8xf32> to vector<8x8xf32>
    %cst_40 = arith.constant dense<0.000000e+00> : vector<8x8xf32>
    %88 = tpu.matmul %85, %86, %cst_40 {dimension_numbers = #tpu.dot_dimension_numbers<[0], [0], [1], [1], [0, 1, 1, 1], [], []>} : vector<8x8xf32>, vector<8x8xf32>, vector<8x8xf32> -> vector<8x8xf32>
    %cst_41 = arith.constant dense<0xFF800000> : vector<8xf32>
    %89 = vector.multi_reduction <maximumf>, %88, %cst_41 [1] : vector<8x8xf32> to vector<8xf32>
    %90 = vector.shape_cast %89 : vector<8xf32> to vector<8x1xf32>
    %91 = vector.broadcast %90 : vector<8x1xf32> to vector<8x8xf32>
    %92 = arith.subf %88, %91 : vector<8x8xf32>
    %93 = math.exp %92 : vector<8x8xf32>
    %cst_42 = arith.constant dense<0.000000e+00> : vector<8xf32>
    %94 = vector.multi_reduction <add>, %93, %cst_42 [1] : vector<8x8xf32> to vector<8xf32>
    %95 = vector.shape_cast %94 : vector<8xf32> to vector<8x1xf32>
    %96 = tpu.reciprocal %95 {approx = true} : vector<8x1xf32> -> vector<8x1xf32>
    %97 = vector.broadcast %96 : vector<8x1xf32> to vector<8x8xf32>
    %98 = arith.mulf %93, %97 : vector<8x8xf32>
    %cst_43 = arith.constant dense<0.000000e+00> : vector<8x8xf32>
    %99 = tpu.matmul %87, %98, %cst_43 {dimension_numbers = #tpu.dot_dimension_numbers<[1], [1], [0], [0], [0, 0, 1, 0], [], []>} : vector<8x8xf32>, vector<8x8xf32>, vector<8x8xf32> -> vector<8x8xf32>
    %c0_44 = arith.constant 0 : index
    %c0_45 = arith.constant 0 : index
    %100 = vector.load %arg7[%c0_44, %c0_45] : memref<32x8xf32, #tpu.memory_space<vmem>>, vector<8x8xf32>
    tpu.vector_store %arg7[%c0_44, %c0_45], %99 {strides = array<i32>} : memref<32x8xf32, #tpu.memory_space<vmem>>, vector<8x8xf32>,
    %101 = vector.extract_strided_slice %84 {offsets = [8, 0], sizes = [8, 8], strides = [1, 1]} : vector<96x8xf32> to vector<8x8xf32>
    %102 = vector.extract_strided_slice %84 {offsets = [40, 0], sizes = [8, 8], strides = [1, 1]} : vector<96x8xf32> to vector<8x8xf32>
    %103 = vector.extract_strided_slice %84 {offsets = [72, 0], sizes = [8, 8], strides = [1, 1]} : vector<96x8xf32> to vector<8x8xf32>
    %cst_46 = arith.constant dense<0.000000e+00> : vector<8x8xf32>
    %104 = tpu.matmul %101, %102, %cst_46 {dimension_numbers = #tpu.dot_dimension_numbers<[0], [0], [1], [1], [0, 1, 1, 1], [], []>} : vector<8x8xf32>, vector<8x8xf32>, vector<8x8xf32> -> vector<8x8xf32>
    %cst_47 = arith.constant dense<0xFF800000> : vector<8xf32>
    %105 = vector.multi_reduction <maximumf>, %104, %cst_47 [1] : vector<8x8xf32> to vector<8xf32>
    %106 = vector.shape_cast %105 : vector<8xf32> to vector<8x1xf32>
    %107 = vector.broadcast %106 : vector<8x1xf32> to vector<8x8xf32>
    %108 = arith.subf %104, %107 : vector<8x8xf32>
    %109 = math.exp %108 : vector<8x8xf32>
    %cst_48 = arith.constant dense<0.000000e+00> : vector<8xf32>
    %110 = vector.multi_reduction <add>, %109, %cst_48 [1] : vector<8x8xf32> to vector<8xf32>
    %111 = vector.shape_cast %110 : vector<8xf32> to vector<8x1xf32>
    %112 = tpu.reciprocal %111 {approx = true} : vector<8x1xf32> -> vector<8x1xf32>
    %113 = vector.broadcast %112 : vector<8x1xf32> to vector<8x8xf32>
    %114 = arith.mulf %109, %113 : vector<8x8xf32>
    %cst_49 = arith.constant dense<0.000000e+00> : vector<8x8xf32>
    %115 = tpu.matmul %103, %114, %cst_49 {dimension_numbers = #tpu.dot_dimension_numbers<[1], [1], [0], [0], [0, 0, 1, 0], [], []>} : vector<8x8xf32>, vector<8x8xf32>, vector<8x8xf32> -> vector<8x8xf32>
    %c8_50 = arith.constant 8 : index
    %c0_51 = arith.constant 0 : index
    %116 = vector.load %arg7[%c8_50, %c0_51] : memref<32x8xf32, #tpu.memory_space<vmem>>, vector<8x8xf32>
    tpu.vector_store %arg7[%c8_50, %c0_51], %115 {strides = array<i32>} : memref<32x8xf32, #tpu.memory_space<vmem>>, vector<8x8xf32>,
    %117 = vector.extract_strided_slice %84 {offsets = [16, 0], sizes = [8, 8], strides = [1, 1]} : vector<96x8xf32> to vector<8x8xf32>
    %118 = vector.extract_strided_slice %84 {offsets = [48, 0], sizes = [8, 8], strides = [1, 1]} : vector<96x8xf32> to vector<8x8xf32>
    %119 = vector.extract_strided_slice %84 {offsets = [80, 0], sizes = [8, 8], strides = [1, 1]} : vector<96x8xf32> to vector<8x8xf32>
    %cst_52 = arith.constant dense<0.000000e+00> : vector<8x8xf32>
    %120 = tpu.matmul %117, %118, %cst_52 {dimension_numbers = #tpu.dot_dimension_numbers<[0], [0], [1], [1], [0, 1, 1, 1], [], []>} : vector<8x8xf32>, vector<8x8xf32>, vector<8x8xf32> -> vector<8x8xf32>
    %cst_53 = arith.constant dense<0xFF800000> : vector<8xf32>
    %121 = vector.multi_reduction <maximumf>, %120, %cst_53 [1] : vector<8x8xf32> to vector<8xf32>
    %122 = vector.shape_cast %121 : vector<8xf32> to vector<8x1xf32>
    %123 = vector.broadcast %122 : vector<8x1xf32> to vector<8x8xf32>
    %124 = arith.subf %120, %123 : vector<8x8xf32>
    %125 = math.exp %124 : vector<8x8xf32>
    %cst_54 = arith.constant dense<0.000000e+00> : vector<8xf32>
    %126 = vector.multi_reduction <add>, %125, %cst_54 [1] : vector<8x8xf32> to vector<8xf32>
    %127 = vector.shape_cast %126 : vector<8xf32> to vector<8x1xf32>
    %128 = tpu.reciprocal %127 {approx = true} : vector<8x1xf32> -> vector<8x1xf32>
    %129 = vector.broadcast %128 : vector<8x1xf32> to vector<8x8xf32>
    %130 = arith.mulf %125, %129 : vector<8x8xf32>
    %cst_55 = arith.constant dense<0.000000e+00> : vector<8x8xf32>
    %131 = tpu.matmul %119, %130, %cst_55 {dimension_numbers = #tpu.dot_dimension_numbers<[1], [1], [0], [0], [0, 0, 1, 0], [], []>} : vector<8x8xf32>, vector<8x8xf32>, vector<8x8xf32> -> vector<8x8xf32>
    %c16_56 = arith.constant 16 : index
    %c0_57 = arith.constant 0 : index
    %132 = vector.load %arg7[%c16_56, %c0_57] : memref<32x8xf32, #tpu.memory_space<vmem>>, vector<8x8xf32>
    tpu.vector_store %arg7[%c16_56, %c0_57], %131 {strides = array<i32>} : memref<32x8xf32, #tpu.memory_space<vmem>>, vector<8x8xf32>,
    %133 = vector.extract_strided_slice %84 {offsets = [24, 0], sizes = [8, 8], strides = [1, 1]} : vector<96x8xf32> to vector<8x8xf32>
    %134 = vector.extract_strided_slice %84 {offsets = [56, 0], sizes = [8, 8], strides = [1, 1]} : vector<96x8xf32> to vector<8x8xf32>
    %135 = vector.extract_strided_slice %84 {offsets = [88, 0], sizes = [8, 8], strides = [1, 1]} : vector<96x8xf32> to vector<8x8xf32>
    %cst_58 = arith.constant dense<0.000000e+00> : vector<8x8xf32>
    %136 = tpu.matmul %133, %134, %cst_58 {dimension_numbers = #tpu.dot_dimension_numbers<[0], [0], [1], [1], [0, 1, 1, 1], [], []>} : vector<8x8xf32>, vector<8x8xf32>, vector<8x8xf32> -> vector<8x8xf32>
    %cst_59 = arith.constant dense<0xFF800000> : vector<8xf32>
    %137 = vector.multi_reduction <maximumf>, %136, %cst_59 [1] : vector<8x8xf32> to vector<8xf32>
    %138 = vector.shape_cast %137 : vector<8xf32> to vector<8x1xf32>
    %139 = vector.broadcast %138 : vector<8x1xf32> to vector<8x8xf32>
    %140 = arith.subf %136, %139 : vector<8x8xf32>
    %141 = math.exp %140 : vector<8x8xf32>
    %cst_60 = arith.constant dense<0.000000e+00> : vector<8xf32>
    %142 = vector.multi_reduction <add>, %141, %cst_60 [1] : vector<8x8xf32> to vector<8xf32>
    %143 = vector.shape_cast %142 : vector<8xf32> to vector<8x1xf32>
    %144 = tpu.reciprocal %143 {approx = true} : vector<8x1xf32> -> vector<8x1xf32>
    %145 = vector.broadcast %144 : vector<8x1xf32> to vector<8x8xf32>
    %146 = arith.mulf %141, %145 : vector<8x8xf32>
    %cst_61 = arith.constant dense<0.000000e+00> : vector<8x8xf32>
    %147 = tpu.matmul %135, %146, %cst_61 {dimension_numbers = #tpu.dot_dimension_numbers<[1], [1], [0], [0], [0, 0, 1, 0], [], []>} : vector<8x8xf32>, vector<8x8xf32>, vector<8x8xf32> -> vector<8x8xf32>
    %c24_62 = arith.constant 24 : index
    %c0_63 = arith.constant 0 : index
    %148 = vector.load %arg7[%c24_62, %c0_63] : memref<32x8xf32, #tpu.memory_space<vmem>>, vector<8x8xf32>
    tpu.vector_store %arg7[%c24_62, %c0_63], %147 {strides = array<i32>} : memref<32x8xf32, #tpu.memory_space<vmem>>, vector<8x8xf32>,
    %c0_64 = arith.constant 0 : index
    %c0_65 = arith.constant 0 : index
    %149 = vector.load %arg7[%c0_64, %c0_65] : memref<32x8xf32, #tpu.memory_space<vmem>>, vector<32x8xf32>
    %cst_66 = arith.constant dense<0.000000e+00> : vector<32x8xf32>
    %150 = tpu.matmul %1, %149, %cst_66 {dimension_numbers = #tpu.dot_dimension_numbers<[1], [0], [0], [1], [0, 0, 1, 1], [], []>} : vector<32x32xf32>, vector<32x8xf32>, vector<32x8xf32> -> vector<32x8xf32>
    %151 = vector.broadcast %3 : vector<32x1xf32> to vector<32x8xf32>
    %152 = arith.addf %150, %151 : vector<32x8xf32>
    %c1_67 = arith.constant 1 : index
    %c0_68 = arith.constant 0 : index
    %c0_69 = arith.constant 0 : index
    %153 = vector.load %arg6[%c1_67, %c0_68, %c0_69] : memref<2x32x8xf32, #tpu.memory_space<vmem>>, vector<1x32x8xf32>
    %154 = vector.shape_cast %153 : vector<1x32x8xf32> to vector<32x8xf32>
    %155 = vector.shape_cast %152 : vector<32x8xf32> to vector<1x32x8xf32>
    tpu.vector_store %arg6[%c1_67, %c0_68, %c0_69], %155 {strides = array<i32>} : memref<2x32x8xf32, #tpu.memory_space<vmem>>, vector<1x32x8xf32>,
    return
  }
  func.func @transform_0(%arg0: i32) -> (i32, i32, i32) {
    %c0_i32 = arith.constant 0 : i32
    %c0_i32_0 = arith.constant 0 : i32
    %c0_i32_1 = arith.constant 0 : i32
    return %arg0, %c0_i32, %c0_i32_0 : i32, i32, i32
  }
  func.func @transform_1(%arg0: i32) -> (i32, i32) {
    %c0_i32 = arith.constant 0 : i32
    %c0_i32_0 = arith.constant 0 : i32
    %c0_i32_1 = arith.constant 0 : i32
    return %c0_i32, %c0_i32_0 : i32, i32
  }
  func.func @transform_2(%arg0: i32) -> (i32, i32) {
    %c0_i32 = arith.constant 0 : i32
    %c0_i32_0 = arith.constant 0 : i32
    %c0_i32_1 = arith.constant 0 : i32
    return %c0_i32, %c0_i32_0 : i32, i32
  }
  func.func @transform_3(%arg0: i32) -> (i32, i32) {
    %c0_i32 = arith.constant 0 : i32
    %c0_i32_0 = arith.constant 0 : i32
    %c0_i32_1 = arith.constant 0 : i32
    return %c0_i32, %c0_i32_0 : i32, i32
  }
  func.func @transform_4(%arg0: i32) -> (i32, i32) {
    %c0_i32 = arith.constant 0 : i32
    %c0_i32_0 = arith.constant 0 : i32
    %c0_i32_1 = arith.constant 0 : i32
    return %c0_i32, %c0_i32_0 : i32, i32
  }
  func.func @transform_5(%arg0: i32) -> (i32, i32, i32) {
    %c0_i32 = arith.constant 0 : i32
    %c0_i32_0 = arith.constant 0 : i32
    %c0_i32_1 = arith.constant 0 : i32
    return %arg0, %c0_i32, %c0_i32_0 : i32, i32, i32
  }
}

</mosaic_0001>

<llo_original>
// kernel: tpu_custom_call.1
$region0: #{tpu_custom_call.1}
  #allocation0 [shape = 'u32[]', space=smem, size = 0x4, offset = 0x4, fixed_abs, tag = 'smem constant byte address 0x4 - core index']
  #allocation1 [shape = 'u32[144,128]{1,0:T(1,128)}', space=vmem, size = 0x12000, scoped, tag = 'internal scratch']
  #allocation2 [shape = 'f32[32,8]{1,0:T(8,128)}', space=vmem, size = 0x4000, scoped, tag = 'scratch operand']
  %s0 = inlined_call_operand.vmem [shape: f32[2,32,8], index: 0, kind: input, shape index: {}]
  %s1 = inlined_call_operand.vmem [shape: f32[96,32], index: 1, kind: input, shape index: {}]
  %s2 = inlined_call_operand.vmem [shape: f32[96,1], index: 2, kind: input, shape index: {}]
  %s3 = inlined_call_operand.vmem [shape: f32[32,32], index: 3, kind: input, shape index: {}]
  %s4 = inlined_call_operand.vmem [shape: f32[32,1], index: 4, kind: input, shape index: {}]
  %s5 = inlined_call_operand.vmem [shape: f32[2,32,8], index: 5, kind: output, shape index: {}]
  %s6 = sld [smem:[#allocation0]]
  $region30: #{tpu_custom_call.1} parent=0
    _
  %s8 = ssub.s32 1, %s6
  %s9 = scalar_select 0, %s8, %s6
  // Predicated region
  $region2: #{tpu_custom_call.1} parent=0 // pred_check
    _
  $region3: #{tpu_custom_call.1} parent=0 // pred_check_branch
    %11 = sbr.rel (0) target = $region5
  $region4: #{tpu_custom_call.1} parent=0 // pred_region
    _
  $region5: #{tpu_custom_call.1} parent=0 // pred_fallthru
    _
  // Predicated region
  $region6: #{tpu_custom_call.1} parent=0 // pred_check
    _
  $region7: #{tpu_custom_call.1} parent=0 // pred_check_branch
    %13 = sbr.rel (0) target = $region9
  $region8: #{tpu_custom_call.1} parent=0 // pred_region
    _
  $region9: #{tpu_custom_call.1} parent=0 // pred_fallthru
    _
  // Predicated region
  $region10: #{tpu_custom_call.1} parent=0 // pred_check
    _
  $region11: #{tpu_custom_call.1} parent=0 // pred_check_branch
    %15 = sbr.rel (0) target = $region13
  $region12: #{tpu_custom_call.1} parent=0 // pred_region
    _
  $region13: #{tpu_custom_call.1} parent=0 // pred_fallthru
    _
  // Predicated region
  $region14: #{tpu_custom_call.1} parent=0 // pred_check
    _
  $region15: #{tpu_custom_call.1} parent=0 // pred_check_branch
    %17 = sbr.rel (0) target = $region17
  $region16: #{tpu_custom_call.1} parent=0 // pred_region
    _
  $region17: #{tpu_custom_call.1} parent=0 // pred_fallthru
    _
  // Predicated region
  $region18: #{tpu_custom_call.1} parent=0 // pred_check
    _
  $region19: #{tpu_custom_call.1} parent=0 // pred_check_branch
    %19 = sbr.rel (0) target = $region21
  $region20: #{tpu_custom_call.1} parent=0 // pred_region
    _
  $region21: #{tpu_custom_call.1} parent=0 // pred_fallthru
    _
  %v20 = vld [vmem:[%s1] sm:$0xff]
  %v21 = vld [vmem:[%s1 + $0x8] sm:$0xff]
  %v22 = vld [vmem:[%s1 + $0x10] sm:$0xff]
  %v23 = vld [vmem:[%s1 + $0x18] sm:$0xff]
  %v24 = vld [vmem:[%s1 + $0x20] sm:$0xff]
  %v25 = vld [vmem:[%s1 + $0x28] sm:$0xff]
  %v26 = vld [vmem:[%s1 + $0x30] sm:$0xff]
  %v27 = vld [vmem:[%s1 + $0x38] sm:$0xff]
  %v28 = vld [vmem:[%s1 + $0x40] sm:$0xff]
  %v29 = vld [vmem:[%s1 + $0x48] sm:$0xff]
  %v30 = vld [vmem:[%s1 + $0x50] sm:$0xff]
  %v31 = vld [vmem:[%s1 + $0x58] sm:$0xff]
  %v32 = vld [vmem:[%s3] sm:$0xff]
  %v33 = vld [vmem:[%s3 + $0x8] sm:$0xff]
  %v34 = vld [vmem:[%s3 + $0x10] sm:$0xff]
  %v35 = vld [vmem:[%s3 + $0x18] sm:$0xff]
  %v36 = vld [vmem:[%s2] sm:$0xff]
  %v37 = vld [vmem:[%s2 + $0x8] sm:$0xff]
  %v38 = vld [vmem:[%s2 + $0x10] sm:$0xff]
  %v39 = vld [vmem:[%s2 + $0x18] sm:$0xff]
  %v40 = vld [vmem:[%s2 + $0x20] sm:$0xff]
  %v41 = vld [vmem:[%s2 + $0x28] sm:$0xff]
  %v42 = vld [vmem:[%s2 + $0x30] sm:$0xff]
  %v43 = vld [vmem:[%s2 + $0x38] sm:$0xff]
  %v44 = vld [vmem:[%s2 + $0x40] sm:$0xff]
  %v45 = vld [vmem:[%s2 + $0x48] sm:$0xff]
  %v46 = vld [vmem:[%s2 + $0x50] sm:$0xff]
  %v47 = vld [vmem:[%s2 + $0x58] sm:$0xff]
  %v48 = vld [vmem:[%s4] sm:$0xff]
  %v49 = vld [vmem:[%s4 + $0x8] sm:$0xff]
  %v50 = vld [vmem:[%s4 + $0x10] sm:$0xff]
  %v51 = vld [vmem:[%s4 + $0x18] sm:$0xff]
  %v52 = vld [vmem:[%s0] sm:$0xff]
  %v53 = vld [vmem:[%s0 + $0x8] sm:$0xff]
  %v54 = vld [vmem:[%s0 + $0x10] sm:$0xff]
  %v55 = vld [vmem:[%s0 + $0x18] sm:$0xff]
  %57 = vset.pattern.permute.xlu0 0
  %58 = vperm.xlu0 %57, %v36
  %v59 = vpop.permute.xlu0 %58
  %62 = vset.pattern.permute.xlu0 0
  %63 = vperm.xlu0 %62, %v37
  %v64 = vpop.permute.xlu0 %63
  %67 = vset.pattern.permute.xlu0 0
  %68 = vperm.xlu0 %67, %v38
  %v69 = vpop.permute.xlu0 %68
  %72 = vset.pattern.permute.xlu0 0
  %73 = vperm.xlu0 %72, %v39
  %v74 = vpop.permute.xlu0 %73
  %77 = vset.pattern.permute.xlu0 0
  %78 = vperm.xlu0 %77, %v40
  %v79 = vpop.permute.xlu0 %78
  %82 = vset.pattern.permute.xlu0 0
  %83 = vperm.xlu0 %82, %v41
  %v84 = vpop.permute.xlu0 %83
  %87 = vset.pattern.permute.xlu0 0
  %88 = vperm.xlu0 %87, %v42
  %v89 = vpop.permute.xlu0 %88
  %92 = vset.pattern.permute.xlu0 0
  %93 = vperm.xlu0 %92, %v43
  %v94 = vpop.permute.xlu0 %93
  %97 = vset.pattern.permute.xlu0 0
  %98 = vperm.xlu0 %97, %v44
  %v99 = vpop.permute.xlu0 %98
  %102 = vset.pattern.permute.xlu0 0
  %103 = vperm.xlu0 %102, %v45
  %v104 = vpop.permute.xlu0 %103
  %107 = vset.pattern.permute.xlu0 0
  %108 = vperm.xlu0 %107, %v46
  %v109 = vpop.permute.xlu0 %108
  %112 = vset.pattern.permute.xlu0 0
  %113 = vperm.xlu0 %112, %v47
  %v114 = vpop.permute.xlu0 %113
  %vm116 = vcmask 261120
  %v118 = vsel %vm116, %v20, 0
  %v121 = vsel %vm116, %v21, 0
  %v124 = vsel %vm116, %v22, 0
  %v127 = vsel %vm116, %v23, 0
  %v130 = vsel %vm116, %v24, 0
  %v133 = vsel %vm116, %v25, 0
  %v136 = vsel %vm116, %v26, 0
  %v139 = vsel %vm116, %v27, 0
  %v142 = vsel %vm116, %v28, 0
  %v145 = vsel %vm116, %v29, 0
  %v148 = vsel %vm116, %v30, 0
  %v151 = vsel %vm116, %v31, 0
  %153 = vmatprep.subr.mxu0 0.0
  %154 = vmatpush1.msra.mxu0 %v52
  %155 = vmatprep.subr.mxu0 0.0
  %156 = vmatpush1.msra.mxu0 %v53
  %157 = vmatprep.subr.mxu0 0.0
  %158 = vmatpush1.msra.mxu0 %v54
  %159 = vmatprep.subr.mxu0 0.0
  %160 = vmatpush1.msra.mxu0 %v55
  %161 = vmatprep.subr.mxu0 0.0
  %162 = vmatpush1.msra.mxu0 0.0
  %163 = vmatprep.subr.mxu0 0.0
  %164 = vmatpush1.msra.mxu0 0.0
  %165 = vmatprep.subr.mxu0 0.0
  %166 = vmatpush1.msra.mxu0 0.0
  %167 = vmatprep.subr.mxu0 0.0
  %168 = vmatpush1.msra.mxu0 0.0
  %169 = vmatprep.subr.mxu0 0.0
  %170 = vmatpush1.msra.mxu0 0.0
  %171 = vmatprep.subr.mxu0 0.0
  %172 = vmatpush1.msra.mxu0 0.0
  %173 = vmatprep.subr.mxu0 0.0
  %174 = vmatpush1.msra.mxu0 0.0
  %175 = vmatprep.subr.mxu0 0.0
  %176 = vmatpush1.msra.mxu0 0.0
  %177 = vmatprep.subr.mxu0 0.0
  %178 = vmatpush1.msra.mxu0 0.0
  %179 = vmatprep.subr.mxu0 0.0
  %180 = vmatpush1.msra.mxu0 0.0
  %181 = vmatprep.subr.mxu0 0.0
  %182 = vmatpush1.msra.mxu0 0.0
  %183 = vmatprep.subr.mxu0 0.0
  %184 = vmatpush1.msra.mxu0 0.0
  %185 = vmatprep.subr.mxu0 0.0
  %186 = vmatpush1.msra.mxu0 0.0
  %187 = vmatprep.subr.mxu0 0.0
  %188 = vmatpush1.msra.mxu0 0.0
  %189 = vmatprep.subr.mxu0 0.0
  %190 = vmatpush1.msra.mxu0 0.0
  %191 = vmatprep.subr.mxu0 0.0
  %192 = vmatpush1.msra.mxu0 0.0
  %193 = vmatprep.subr.mxu0 0.0
  %194 = vmatpush1.msra.mxu0 0.0
  %195 = vmatprep.subr.mxu0 0.0
  %196 = vmatpush1.msra.mxu0 0.0
  %197 = vmatprep.subr.mxu0 0.0
  %198 = vmatpush1.msra.mxu0 0.0
  %199 = vmatprep.subr.mxu0 0.0
  %200 = vmatpush1.msra.mxu0 0.0
  %201 = vmatprep.subr.mxu0 0.0
  %202 = vmatpush1.msra.mxu0 0.0
  %203 = vmatprep.subr.mxu0 0.0
  %204 = vmatpush1.msra.mxu0 0.0
  %205 = vmatprep.subr.mxu0 0.0
  %206 = vmatpush1.msra.mxu0 0.0
  %207 = vmatprep.subr.mxu0 0.0
  %208 = vmatpush1.msra.mxu0 0.0
  %209 = vmatprep.subr.mxu0 0.0
  %210 = vmatpush1.msra.mxu0 0.0
  %211 = vmatprep.subr.mxu0 0.0
  %212 = vmatpush1.msra.mxu0 0.0
  %213 = vmatprep.subr.mxu0 0.0
  %214 = vmatpush1.msra.mxu0 0.0
  %215 = vmatprep.subr.mxu0 0.0
  %216 = vmatpush1.msra.mxu0 0.0
  %217 = vmatprep.mubr.f32.mxu0 0.0
  %218 = vmatmul.mubr.f32.gmra.mrb[0].mxu0 %v118
  %v219 = vpop.f32.mrb[0].mxu0
  %v220 = vadd.f32 %v59, %v219
  %v221 = vpop.f32.mrb[0].mxu0
  %222 = vmatprep.mubr.f32.mxu0 0.0
  %223 = vmatmul.mubr.f32.gmra.mrb[0].mxu0 %v121
  %v224 = vpop.f32.mrb[0].mxu0
  %v225 = vadd.f32 %v64, %v224
  %v226 = vpop.f32.mrb[0].mxu0
  %227 = vmatprep.mubr.f32.mxu0 0.0
  %228 = vmatmul.mubr.f32.gmra.mrb[0].mxu0 %v124
  %v229 = vpop.f32.mrb[0].mxu0
  %v230 = vadd.f32 %v69, %v229
  %v231 = vpop.f32.mrb[0].mxu0
  %232 = vmatprep.mubr.f32.mxu0 0.0
  %233 = vmatmul.mubr.f32.gmra.mrb[0].mxu0 %v127
  %v234 = vpop.f32.mrb[0].mxu0
  %v235 = vadd.f32 %v74, %v234
  %v236 = vpop.f32.mrb[0].mxu0
  %237 = vmatprep.mubr.f32.mxu0 0.0
  %238 = vmatmul.mubr.f32.gmra.mrb[0].mxu0 %v130
  %v239 = vpop.f32.mrb[0].mxu0
  %v240 = vadd.f32 %v79, %v239
  %v241 = vpop.f32.mrb[0].mxu0
  %242 = vmatprep.mubr.f32.mxu0 0.0
  %243 = vmatmul.mubr.f32.gmra.mrb[0].mxu0 %v133
  %v244 = vpop.f32.mrb[0].mxu0
  %v245 = vadd.f32 %v84, %v244
  %v246 = vpop.f32.mrb[0].mxu0
  %247 = vmatprep.mubr.f32.mxu0 0.0
  %248 = vmatmul.mubr.f32.gmra.mrb[0].mxu0 %v136
  %v249 = vpop.f32.mrb[0].mxu0
  %v250 = vadd.f32 %v89, %v249
  %v251 = vpop.f32.mrb[0].mxu0
  %252 = vmatprep.mubr.f32.mxu0 0.0
  %253 = vmatmul.mubr.f32.gmra.mrb[0].mxu0 %v139
  %v254 = vpop.f32.mrb[0].mxu0
  %v255 = vadd.f32 %v94, %v254
  %v256 = vpop.f32.mrb[0].mxu0
  %257 = vmatprep.mubr.f32.mxu0 0.0
  %258 = vmatmul.mubr.f32.gmra.mrb[0].mxu0 %v142
  %v259 = vpop.f32.mrb[0].mxu0
  %v260 = vadd.f32 %v99, %v259
  %v261 = vpop.f32.mrb[0].mxu0
  %262 = vmatprep.mubr.f32.mxu0 0.0
  %263 = vmatmul.mubr.f32.gmra.mrb[0].mxu0 %v145
  %v264 = vpop.f32.mrb[0].mxu0
  %v265 = vadd.f32 %v104, %v264
  %v266 = vpop.f32.mrb[0].mxu0
  %267 = vmatprep.mubr.f32.mxu0 0.0
  %268 = vmatmul.mubr.f32.gmra.mrb[0].mxu0 %v148
  %v269 = vpop.f32.mrb[0].mxu0
  %v270 = vadd.f32 %v109, %v269
  %v271 = vpop.f32.mrb[0].mxu0
  %272 = vmatprep.mubr.f32.mxu0 0.0
  %273 = vmatmul.mubr.f32.gmra.mrb[0].mxu0 %v151
  %v274 = vpop.f32.mrb[0].mxu0
  %v275 = vadd.f32 %v114, %v274
  %v276 = vpop.f32.mrb[0].mxu0
  %277 = vdwg.mxu0
  %278 = vxpose.xlu0.b32.start [1/16] %v220, 128
  %279 = vxpose.xlu0.b32.cont [2/16] 0.0, 128
  %280 = vxpose.xlu0.b32.cont [3/16] 0.0, 128
  %281 = vxpose.xlu0.b32.cont [4/16] 0.0, 128
  %282 = vxpose.xlu0.b32.cont [5/16] 0.0, 128
  %283 = vxpose.xlu0.b32.cont [6/16] 0.0, 128
  %284 = vxpose.xlu0.b32.cont [7/16] 0.0, 128
  %285 = vxpose.xlu0.b32.cont [8/16] 0.0, 128
  %286 = vxpose.xlu0.b32.cont [9/16] 0.0, 128
  %287 = vxpose.xlu0.b32.cont [10/16] 0.0, 128
  %288 = vxpose.xlu0.b32.cont [11/16] 0.0, 128
  %289 = vxpose.xlu0.b32.cont [12/16] 0.0, 128
  %290 = vxpose.xlu0.b32.cont [13/16] 0.0, 128
  %291 = vxpose.xlu0.b32.cont [14/16] 0.0, 128
  %292 = vxpose.xlu0.b32.cont [15/16] 0.0, 128
  %293 = vxpose.xlu0.b32.end [16/16] 0.0, 128
  %v294 = vpop.trf.xlu0
  %v295 = vpop.trf.xlu0
  %v296 = vpop.trf.xlu0
  %v297 = vpop.trf.xlu0
  %v298 = vpop.trf.xlu0
  %v299 = vpop.trf.xlu0
  %v300 = vpop.trf.xlu0
  %v301 = vpop.trf.xlu0
  %v302 = vpop.trf.xlu0
  %v303 = vpop.trf.xlu0
  %v304 = vpop.trf.xlu0
  %v305 = vpop.trf.xlu0
  %v306 = vpop.trf.xlu0
  %v307 = vpop.trf.xlu0
  %v308 = vpop.trf.xlu0
  %v309 = vpop.trf.xlu0
  %vm310 = vcmask 64512
  %v312 = vsel %vm310, %v294, 0
  %314 = vmatprep.subr.mxu0 0.0
  %315 = vmatpush1.msra.mxu0 %v240
  %316 = vmatprep.subr.mxu0 0.0
  %317 = vmatpush1.msra.mxu0 0.0
  %318 = vmatprep.subr.mxu0 0.0
  %319 = vmatpush1.msra.mxu0 0.0
  %320 = vmatprep.subr.mxu0 0.0
  %321 = vmatpush1.msra.mxu0 0.0
  %322 = vmatprep.subr.mxu0 0.0
  %323 = vmatpush1.msra.mxu0 0.0
  %324 = vmatprep.subr.mxu0 0.0
  %325 = vmatpush1.msra.mxu0 0.0
  %326 = vmatprep.subr.mxu0 0.0
  %327 = vmatpush1.msra.mxu0 0.0
  %328 = vmatprep.subr.mxu0 0.0
  %329 = vmatpush1.msra.mxu0 0.0
  %330 = vmatprep.subr.mxu0 0.0
  %331 = vmatpush1.msra.mxu0 0.0
  %332 = vmatprep.subr.mxu0 0.0
  %333 = vmatpush1.msra.mxu0 0.0
  %334 = vmatprep.subr.mxu0 0.0
  %335 = vmatpush1.msra.mxu0 0.0
  %336 = vmatprep.subr.mxu0 0.0
  %337 = vmatpush1.msra.mxu0 0.0
  %338 = vmatprep.subr.mxu0 0.0
  %339 = vmatpush1.msra.mxu0 0.0
  %340 = vmatprep.subr.mxu0 0.0
  %341 = vmatpush1.msra.mxu0 0.0
  %342 = vmatprep.subr.mxu0 0.0
  %343 = vmatpush1.msra.mxu0 0.0
  %344 = vmatprep.subr.mxu0 0.0
  %345 = vmatpush1.msra.mxu0 0.0
  %346 = vmatprep.subr.mxu0 0.0
  %347 = vmatpush1.msra.mxu0 0.0
  %348 = vmatprep.subr.mxu0 0.0
  %349 = vmatpush1.msra.mxu0 0.0
  %350 = vmatprep.subr.mxu0 0.0
  %351 = vmatpush1.msra.mxu0 0.0
  %352 = vmatprep.subr.mxu0 0.0
  %353 = vmatpush1.msra.mxu0 0.0
  %354 = vmatprep.subr.mxu0 0.0
  %355 = vmatpush1.msra.mxu0 0.0
  %356 = vmatprep.subr.mxu0 0.0
  %357 = vmatpush1.msra.mxu0 0.0
  %358 = vmatprep.subr.mxu0 0.0
  %359 = vmatpush1.msra.mxu0 0.0
  %360 = vmatprep.subr.mxu0 0.0
  %361 = vmatpush1.msra.mxu0 0.0
  %362 = vmatprep.subr.mxu0 0.0
  %363 = vmatpush1.msra.mxu0 0.0
  %364 = vmatprep.subr.mxu0 0.0
  %365 = vmatpush1.msra.mxu0 0.0
  %366 = vmatprep.subr.mxu0 0.0
  %367 = vmatpush1.msra.mxu0 0.0
  %368 = vmatprep.subr.mxu0 0.0
  %369 = vmatpush1.msra.mxu0 0.0
  %370 = vmatprep.subr.mxu0 0.0
  %371 = vmatpush1.msra.mxu0 0.0
  %372 = vmatprep.subr.mxu0 0.0
  %373 = vmatpush1.msra.mxu0 0.0
  %374 = vmatprep.subr.mxu0 0.0
  %375 = vmatpush1.msra.mxu0 0.0
  %376 = vmatprep.subr.mxu0 0.0
  %377 = vmatpush1.msra.mxu0 0.0
  %378 = vmatprep.mubr.f32.mxu0 0.0
  %379 = vmatmul.mubr.f32.gmra.mrb[0].mxu0 %v312
  %v380 = vpop.f32.mrb[0].mxu0
  %v381 = vadd.f32 0.0, %v380
  %v382 = vpop.f32.mrb[0].mxu0
  %383 = vdwg.mxu0
  %v384 = vsel %vm310, %v381, -inf
  %385 = vmax.xlane.f32.xlu0 %v384
  %v386 = vpop.xlane.xlu0 %385
  %v387 = vsub.f32 %v381, %v386
  %v388 = vmul.f32 %v387, 1.442695
  %v389 = vpow.pop %v388
  %v390 = vsel %vm310, %v389, 0.0
  %391 = vadd.xlane.f32.xlu0 %v390
  %v392 = vpop.xlane.xlu0 %391
  %v393 = vrcp.pop %v392
  %v394 = vmul.f32 %v389, %v393
  %v396 = vsel %vm310, %v260, 0
  %v399 = vsel %vm310, %v394, 0
  %401 = vmatprep.subr.mxu0 0.0
  %402 = vmatpush1.xpose.msra.mxu0 %v399
  %403 = vmatprep.subr.mxu0 0.0
  %404 = vmatpush1.xpose.msra.mxu0 0.0
  %405 = vmatprep.subr.mxu0 0.0
  %406 = vmatpush1.xpose.msra.mxu0 0.0
  %407 = vmatprep.subr.mxu0 0.0
  %408 = vmatpush1.xpose.msra.mxu0 0.0
  %409 = vmatprep.subr.mxu0 0.0
  %410 = vmatpush1.xpose.msra.mxu0 0.0
  %411 = vmatprep.subr.mxu0 0.0
  %412 = vmatpush1.xpose.msra.mxu0 0.0
  %413 = vmatprep.subr.mxu0 0.0
  %414 = vmatpush1.xpose.msra.mxu0 0.0
  %415 = vmatprep.subr.mxu0 0.0
  %416 = vmatpush1.xpose.msra.mxu0 0.0
  %417 = vmatprep.subr.mxu0 0.0
  %418 = vmatpush1.xpose.msra.mxu0 0.0
  %419 = vmatprep.subr.mxu0 0.0
  %420 = vmatpush1.xpose.msra.mxu0 0.0
  %421 = vmatprep.subr.mxu0 0.0
  %422 = vmatpush1.xpose.msra.mxu0 0.0
  %423 = vmatprep.subr.mxu0 0.0
  %424 = vmatpush1.xpose.msra.mxu0 0.0
  %425 = vmatprep.subr.mxu0 0.0
  %426 = vmatpush1.xpose.msra.mxu0 0.0
  %427 = vmatprep.subr.mxu0 0.0
  %428 = vmatpush1.xpose.msra.mxu0 0.0
  %429 = vmatprep.subr.mxu0 0.0
  %430 = vmatpush1.xpose.msra.mxu0 0.0
  %431 = vmatprep.subr.mxu0 0.0
  %432 = vmatpush1.xpose.msra.mxu0 0.0
  %433 = vmatprep.subr.mxu0 0.0
  %434 = vmatpush1.xpose.msra.mxu0 0.0
  %435 = vmatprep.subr.mxu0 0.0
  %436 = vmatpush1.xpose.msra.mxu0 0.0
  %437 = vmatprep.subr.mxu0 0.0
  %438 = vmatpush1.xpose.msra.mxu0 0.0
  %439 = vmatprep.subr.mxu0 0.0
  %440 = vmatpush1.xpose.msra.mxu0 0.0
  %441 = vmatprep.subr.mxu0 0.0
  %442 = vmatpush1.xpose.msra.mxu0 0.0
  %443 = vmatprep.subr.mxu0 0.0
  %444 = vmatpush1.xpose.msra.mxu0 0.0
  %445 = vmatprep.subr.mxu0 0.0
  %446 = vmatpush1.xpose.msra.mxu0 0.0
  %447 = vmatprep.subr.mxu0 0.0
  %448 = vmatpush1.xpose.msra.mxu0 0.0
  %449 = vmatprep.subr.mxu0 0.0
  %450 = vmatpush1.xpose.msra.mxu0 0.0
  %451 = vmatprep.subr.mxu0 0.0
  %452 = vmatpush1.xpose.msra.mxu0 0.0
  %453 = vmatprep.subr.mxu0 0.0
  %454 = vmatpush1.xpose.msra.mxu0 0.0
  %455 = vmatprep.subr.mxu0 0.0
  %456 = vmatpush1.xpose.msra.mxu0 0.0
  %457 = vmatprep.subr.mxu0 0.0
  %458 = vmatpush1.xpose.msra.mxu0 0.0
  %459 = vmatprep.subr.mxu0 0.0
  %460 = vmatpush1.xpose.msra.mxu0 0.0
  %461 = vmatprep.subr.mxu0 0.0
  %462 = vmatpush1.xpose.msra.mxu0 0.0
  %463 = vmatprep.subr.mxu0 0.0
  %464 = vmatpush1.xpose.msra.mxu0 0.0
  %465 = vmatprep.mubr.f32.mxu0 0.0
  %466 = vmatmul.mubr.f32.gmra.mrb[0].mxu0 %v396
  %v467 = vpop.f32.mrb[0].mxu0
  %v468 = vadd.f32 0.0, %v467
  %v469 = vpop.f32.mrb[0].mxu0
  %470 = vdwg.mxu0
  %471 = vst.msk [vmem:[#allocation2] sm:$0xff] %vm310, %v468
  %472 = vxpose.xlu0.b32.start [1/16] %v225, 128
  %473 = vxpose.xlu0.b32.cont [2/16] 0.0, 128
  %474 = vxpose.xlu0.b32.cont [3/16] 0.0, 128
  %475 = vxpose.xlu0.b32.cont [4/16] 0.0, 128
  %476 = vxpose.xlu0.b32.cont [5/16] 0.0, 128
  %477 = vxpose.xlu0.b32.cont [6/16] 0.0, 128
  %478 = vxpose.xlu0.b32.cont [7/16] 0.0, 128
  %479 = vxpose.xlu0.b32.cont [8/16] 0.0, 128
  %480 = vxpose.xlu0.b32.cont [9/16] 0.0, 128
  %481 = vxpose.xlu0.b32.cont [10/16] 0.0, 128
  %482 = vxpose.xlu0.b32.cont [11/16] 0.0, 128
  %483 = vxpose.xlu0.b32.cont [12/16] 0.0, 128
  %484 = vxpose.xlu0.b32.cont [13/16] 0.0, 128
  %485 = vxpose.xlu0.b32.cont [14/16] 0.0, 128
  %486 = vxpose.xlu0.b32.cont [15/16] 0.0, 128
  %487 = vxpose.xlu0.b32.end [16/16] 0.0, 128
  %v488 = vpop.trf.xlu0
  %v489 = vpop.trf.xlu0
  %v490 = vpop.trf.xlu0
  %v491 = vpop.trf.xlu0
  %v492 = vpop.trf.xlu0
  %v493 = vpop.trf.xlu0
  %v494 = vpop.trf.xlu0
  %v495 = vpop.trf.xlu0
  %v496 = vpop.trf.xlu0
  %v497 = vpop.trf.xlu0
  %v498 = vpop.trf.xlu0
  %v499 = vpop.trf.xlu0
  %v500 = vpop.trf.xlu0
  %v501 = vpop.trf.xlu0
  %v502 = vpop.trf.xlu0
  %v503 = vpop.trf.xlu0
  %v505 = vsel %vm310, %v488, 0
  %507 = vmatprep.subr.mxu0 0.0
  %508 = vmatpush1.msra.mxu0 %v245
  %509 = vmatprep.subr.mxu0 0.0
  %510 = vmatpush1.msra.mxu0 0.0
  %511 = vmatprep.subr.mxu0 0.0
  %512 = vmatpush1.msra.mxu0 0.0
  %513 = vmatprep.subr.mxu0 0.0
  %514 = vmatpush1.msra.mxu0 0.0
  %515 = vmatprep.subr.mxu0 0.0
  %516 = vmatpush1.msra.mxu0 0.0
  %517 = vmatprep.subr.mxu0 0.0
  %518 = vmatpush1.msra.mxu0 0.0
  %519 = vmatprep.subr.mxu0 0.0
  %520 = vmatpush1.msra.mxu0 0.0
  %521 = vmatprep.subr.mxu0 0.0
  %522 = vmatpush1.msra.mxu0 0.0
  %523 = vmatprep.subr.mxu0 0.0
  %524 = vmatpush1.msra.mxu0 0.0
  %525 = vmatprep.subr.mxu0 0.0
  %526 = vmatpush1.msra.mxu0 0.0
  %527 = vmatprep.subr.mxu0 0.0
  %528 = vmatpush1.msra.mxu0 0.0
  %529 = vmatprep.subr.mxu0 0.0
  %530 = vmatpush1.msra.mxu0 0.0
  %531 = vmatprep.subr.mxu0 0.0
  %532 = vmatpush1.msra.mxu0 0.0
  %533 = vmatprep.subr.mxu0 0.0
  %534 = vmatpush1.msra.mxu0 0.0
  %535 = vmatprep.subr.mxu0 0.0
  %536 = vmatpush1.msra.mxu0 0.0
  %537 = vmatprep.subr.mxu0 0.0
  %538 = vmatpush1.msra.mxu0 0.0
  %539 = vmatprep.subr.mxu0 0.0
  %540 = vmatpush1.msra.mxu0 0.0
  %541 = vmatprep.subr.mxu0 0.0
  %542 = vmatpush1.msra.mxu0 0.0
  %543 = vmatprep.subr.mxu0 0.0
  %544 = vmatpush1.msra.mxu0 0.0
  %545 = vmatprep.subr.mxu0 0.0
  %546 = vmatpush1.msra.mxu0 0.0
  %547 = vmatprep.subr.mxu0 0.0
  %548 = vmatpush1.msra.mxu0 0.0
  %549 = vmatprep.subr.mxu0 0.0
  %550 = vmatpush1.msra.mxu0 0.0
  %551 = vmatprep.subr.mxu0 0.0
  %552 = vmatpush1.msra.mxu0 0.0
  %553 = vmatprep.subr.mxu0 0.0
  %554 = vmatpush1.msra.mxu0 0.0
  %555 = vmatprep.subr.mxu0 0.0
  %556 = vmatpush1.msra.mxu0 0.0
  %557 = vmatprep.subr.mxu0 0.0
  %558 = vmatpush1.msra.mxu0 0.0
  %559 = vmatprep.subr.mxu0 0.0
  %560 = vmatpush1.msra.mxu0 0.0
  %561 = vmatprep.subr.mxu0 0.0
  %562 = vmatpush1.msra.mxu0 0.0
  %563 = vmatprep.subr.mxu0 0.0
  %564 = vmatpush1.msra.mxu0 0.0
  %565 = vmatprep.subr.mxu0 0.0
  %566 = vmatpush1.msra.mxu0 0.0
  %567 = vmatprep.subr.mxu0 0.0
  %568 = vmatpush1.msra.mxu0 0.0
  %569 = vmatprep.subr.mxu0 0.0
  %570 = vmatpush1.msra.mxu0 0.0
  %571 = vmatprep.mubr.f32.mxu0 0.0
  %572 = vmatmul.mubr.f32.gmra.mrb[0].mxu0 %v505
  %v573 = vpop.f32.mrb[0].mxu0
  %v574 = vadd.f32 0.0, %v573
  %v575 = vpop.f32.mrb[0].mxu0
  %576 = vdwg.mxu0
  %v577 = vsel %vm310, %v574, -inf
  %578 = vmax.xlane.f32.xlu0 %v577
  %v579 = vpop.xlane.xlu0 %578
  %v580 = vsub.f32 %v574, %v579
  %v581 = vmul.f32 %v580, 1.442695
  %v582 = vpow.pop %v581
  %v583 = vsel %vm310, %v582, 0.0
  %584 = vadd.xlane.f32.xlu0 %v583
  %v585 = vpop.xlane.xlu0 %584
  %v586 = vrcp.pop %v585
  %v587 = vmul.f32 %v582, %v586
  %v589 = vsel %vm310, %v265, 0
  %v592 = vsel %vm310, %v587, 0
  %594 = vmatprep.subr.mxu0 0.0
  %595 = vmatpush1.xpose.msra.mxu0 %v592
  %596 = vmatprep.subr.mxu0 0.0
  %597 = vmatpush1.xpose.msra.mxu0 0.0
  %598 = vmatprep.subr.mxu0 0.0
  %599 = vmatpush1.xpose.msra.mxu0 0.0
  %600 = vmatprep.subr.mxu0 0.0
  %601 = vmatpush1.xpose.msra.mxu0 0.0
  %602 = vmatprep.subr.mxu0 0.0
  %603 = vmatpush1.xpose.msra.mxu0 0.0
  %604 = vmatprep.subr.mxu0 0.0
  %605 = vmatpush1.xpose.msra.mxu0 0.0
  %606 = vmatprep.subr.mxu0 0.0
  %607 = vmatpush1.xpose.msra.mxu0 0.0
  %608 = vmatprep.subr.mxu0 0.0
  %609 = vmatpush1.xpose.msra.mxu0 0.0
  %610 = vmatprep.subr.mxu0 0.0
  %611 = vmatpush1.xpose.msra.mxu0 0.0
  %612 = vmatprep.subr.mxu0 0.0
  %613 = vmatpush1.xpose.msra.mxu0 0.0
  %614 = vmatprep.subr.mxu0 0.0
  %615 = vmatpush1.xpose.msra.mxu0 0.0
  %616 = vmatprep.subr.mxu0 0.0
  %617 = vmatpush1.xpose.msra.mxu0 0.0
  %618 = vmatprep.subr.mxu0 0.0
  %619 = vmatpush1.xpose.msra.mxu0 0.0
  %620 = vmatprep.subr.mxu0 0.0
  %621 = vmatpush1.xpose.msra.mxu0 0.0
  %622 = vmatprep.subr.mxu0 0.0
  %623 = vmatpush1.xpose.msra.mxu0 0.0
  %624 = vmatprep.subr.mxu0 0.0
  %625 = vmatpush1.xpose.msra.mxu0 0.0
  %626 = vmatprep.subr.mxu0 0.0
  %627 = vmatpush1.xpose.msra.mxu0 0.0
  %628 = vmatprep.subr.mxu0 0.0
  %629 = vmatpush1.xpose.msra.mxu0 0.0
  %630 = vmatprep.subr.mxu0 0.0
  %631 = vmatpush1.xpose.msra.mxu0 0.0
  %632 = vmatprep.subr.mxu0 0.0
  %633 = vmatpush1.xpose.msra.mxu0 0.0
  %634 = vmatprep.subr.mxu0 0.0
  %635 = vmatpush1.xpose.msra.mxu0 0.0
  %636 = vmatprep.subr.mxu0 0.0
  %637 = vmatpush1.xpose.msra.mxu0 0.0
  %638 = vmatprep.subr.mxu0 0.0
  %639 = vmatpush1.xpose.msra.mxu0 0.0
  %640 = vmatprep.subr.mxu0 0.0
  %641 = vmatpush1.xpose.msra.mxu0 0.0
  %642 = vmatprep.subr.mxu0 0.0
  %643 = vmatpush1.xpose.msra.mxu0 0.0
  %644 = vmatprep.subr.mxu0 0.0
  %645 = vmatpush1.xpose.msra.mxu0 0.0
  %646 = vmatprep.subr.mxu0 0.0
  %647 = vmatpush1.xpose.msra.mxu0 0.0
  %648 = vmatprep.subr.mxu0 0.0
  %649 = vmatpush1.xpose.msra.mxu0 0.0
  %650 = vmatprep.subr.mxu0 0.0
  %651 = vmatpush1.xpose.msra.mxu0 0.0
  %652 = vmatprep.subr.mxu0 0.0
  %653 = vmatpush1.xpose.msra.mxu0 0.0
  %654 = vmatprep.subr.mxu0 0.0
  %655 = vmatpush1.xpose.msra.mxu0 0.0
  %656 = vmatprep.subr.mxu0 0.0
  %657 = vmatpush1.xpose.msra.mxu0 0.0
  %658 = vmatprep.mubr.f32.mxu0 0.0
  %659 = vmatmul.mubr.f32.gmra.mrb[0].mxu0 %v589
  %v660 = vpop.f32.mrb[0].mxu0
  %v661 = vadd.f32 0.0, %v660
  %v662 = vpop.f32.mrb[0].mxu0
  %663 = vdwg.mxu0
  %664 = vst.msk [vmem:[#allocation2 + $0x8] sm:$0xff] %vm310, %v661
  %665 = vxpose.xlu0.b32.start [1/16] %v230, 128
  %666 = vxpose.xlu0.b32.cont [2/16] 0.0, 128
  %667 = vxpose.xlu0.b32.cont [3/16] 0.0, 128
  %668 = vxpose.xlu0.b32.cont [4/16] 0.0, 128
  %669 = vxpose.xlu0.b32.cont [5/16] 0.0, 128
  %670 = vxpose.xlu0.b32.cont [6/16] 0.0, 128
  %671 = vxpose.xlu0.b32.cont [7/16] 0.0, 128
  %672 = vxpose.xlu0.b32.cont [8/16] 0.0, 128
  %673 = vxpose.xlu0.b32.cont [9/16] 0.0, 128
  %674 = vxpose.xlu0.b32.cont [10/16] 0.0, 128
  %675 = vxpose.xlu0.b32.cont [11/16] 0.0, 128
  %676 = vxpose.xlu0.b32.cont [12/16] 0.0, 128
  %677 = vxpose.xlu0.b32.cont [13/16] 0.0, 128
  %678 = vxpose.xlu0.b32.cont [14/16] 0.0, 128
  %679 = vxpose.xlu0.b32.cont [15/16] 0.0, 128
  %680 = vxpose.xlu0.b32.end [16/16] 0.0, 128
  %v681 = vpop.trf.xlu0
  %v682 = vpop.trf.xlu0
  %v683 = vpop.trf.xlu0
  %v684 = vpop.trf.xlu0
  %v685 = vpop.trf.xlu0
  %v686 = vpop.trf.xlu0
  %v687 = vpop.trf.xlu0
  %v688 = vpop.trf.xlu0
  %v689 = vpop.trf.xlu0
  %v690 = vpop.trf.xlu0
  %v691 = vpop.trf.xlu0
  %v692 = vpop.trf.xlu0
  %v693 = vpop.trf.xlu0
  %v694 = vpop.trf.xlu0
  %v695 = vpop.trf.xlu0
  %v696 = vpop.trf.xlu0
  %v698 = vsel %vm310, %v681, 0
  %700 = vmatprep.subr.mxu0 0.0
  %701 = vmatpush1.msra.mxu0 %v250
  %702 = vmatprep.subr.mxu0 0.0
  %703 = vmatpush1.msra.mxu0 0.0
  %704 = vmatprep.subr.mxu0 0.0
  %705 = vmatpush1.msra.mxu0 0.0
  %706 = vmatprep.subr.mxu0 0.0
  %707 = vmatpush1.msra.mxu0 0.0
  %708 = vmatprep.subr.mxu0 0.0
  %709 = vmatpush1.msra.mxu0 0.0
  %710 = vmatprep.subr.mxu0 0.0
  %711 = vmatpush1.msra.mxu0 0.0
  %712 = vmatprep.subr.mxu0 0.0
  %713 = vmatpush1.msra.mxu0 0.0
  %714 = vmatprep.subr.mxu0 0.0
  %715 = vmatpush1.msra.mxu0 0.0
  %716 = vmatprep.subr.mxu0 0.0
  %717 = vmatpush1.msra.mxu0 0.0
  %718 = vmatprep.subr.mxu0 0.0
  %719 = vmatpush1.msra.mxu0 0.0
  %720 = vmatprep.subr.mxu0 0.0
  %721 = vmatpush1.msra.mxu0 0.0
  %722 = vmatprep.subr.mxu0 0.0
  %723 = vmatpush1.msra.mxu0 0.0
  %724 = vmatprep.subr.mxu0 0.0
  %725 = vmatpush1.msra.mxu0 0.0
  %726 = vmatprep.subr.mxu0 0.0
  %727 = vmatpush1.msra.mxu0 0.0
  %728 = vmatprep.subr.mxu0 0.0
  %729 = vmatpush1.msra.mxu0 0.0
  %730 = vmatprep.subr.mxu0 0.0
  %731 = vmatpush1.msra.mxu0 0.0
  %732 = vmatprep.subr.mxu0 0.0
  %733 = vmatpush1.msra.mxu0 0.0
  %734 = vmatprep.subr.mxu0 0.0
  %735 = vmatpush1.msra.mxu0 0.0
  %736 = vmatprep.subr.mxu0 0.0
  %737 = vmatpush1.msra.mxu0 0.0
  %738 = vmatprep.subr.mxu0 0.0
  %739 = vmatpush1.msra.mxu0 0.0
  %740 = vmatprep.subr.mxu0 0.0
  %741 = vmatpush1.msra.mxu0 0.0
  %742 = vmatprep.subr.mxu0 0.0
  %743 = vmatpush1.msra.mxu0 0.0
  %744 = vmatprep.subr.mxu0 0.0
  %745 = vmatpush1.msra.mxu0 0.0
  %746 = vmatprep.subr.mxu0 0.0
  %747 = vmatpush1.msra.mxu0 0.0
  %748 = vmatprep.subr.mxu0 0.0
  %749 = vmatpush1.msra.mxu0 0.0
  %750 = vmatprep.subr.mxu0 0.0
  %751 = vmatpush1.msra.mxu0 0.0
  %752 = vmatprep.subr.mxu0 0.0
  %753 = vmatpush1.msra.mxu0 0.0
  %754 = vmatprep.subr.mxu0 0.0
  %755 = vmatpush1.msra.mxu0 0.0
  %756 = vmatprep.subr.mxu0 0.0
  %757 = vmatpush1.msra.mxu0 0.0
  %758 = vmatprep.subr.mxu0 0.0
  %759 = vmatpush1.msra.mxu0 0.0
  %760 = vmatprep.subr.mxu0 0.0
  %761 = vmatpush1.msra.mxu0 0.0
  %762 = vmatprep.subr.mxu0 0.0
  %763 = vmatpush1.msra.mxu0 0.0
  %764 = vmatprep.mubr.f32.mxu0 0.0
  %765 = vmatmul.mubr.f32.gmra.mrb[0].mxu0 %v698
  %v766 = vpop.f32.mrb[0].mxu0
  %v767 = vadd.f32 0.0, %v766
  %v768 = vpop.f32.mrb[0].mxu0
  %769 = vdwg.mxu0
  %v770 = vsel %vm310, %v767, -inf
  %771 = vmax.xlane.f32.xlu0 %v770
  %v772 = vpop.xlane.xlu0 %771
  %v773 = vsub.f32 %v767, %v772
  %v774 = vmul.f32 %v773, 1.442695
  %v775 = vpow.pop %v774
  %v776 = vsel %vm310, %v775, 0.0
  %777 = vadd.xlane.f32.xlu0 %v776
  %v778 = vpop.xlane.xlu0 %777
  %v779 = vrcp.pop %v778
  %v780 = vmul.f32 %v775, %v779
  %v782 = vsel %vm310, %v270, 0
  %v785 = vsel %vm310, %v780, 0
  %787 = vmatprep.subr.mxu0 0.0
  %788 = vmatpush1.xpose.msra.mxu0 %v785
  %789 = vmatprep.subr.mxu0 0.0
  %790 = vmatpush1.xpose.msra.mxu0 0.0
  %791 = vmatprep.subr.mxu0 0.0
  %792 = vmatpush1.xpose.msra.mxu0 0.0
  %793 = vmatprep.subr.mxu0 0.0
  %794 = vmatpush1.xpose.msra.mxu0 0.0
  %795 = vmatprep.subr.mxu0 0.0
  %796 = vmatpush1.xpose.msra.mxu0 0.0
  %797 = vmatprep.subr.mxu0 0.0
  %798 = vmatpush1.xpose.msra.mxu0 0.0
  %799 = vmatprep.subr.mxu0 0.0
  %800 = vmatpush1.xpose.msra.mxu0 0.0
  %801 = vmatprep.subr.mxu0 0.0
  %802 = vmatpush1.xpose.msra.mxu0 0.0
  %803 = vmatprep.subr.mxu0 0.0
  %804 = vmatpush1.xpose.msra.mxu0 0.0
  %805 = vmatprep.subr.mxu0 0.0
  %806 = vmatpush1.xpose.msra.mxu0 0.0
  %807 = vmatprep.subr.mxu0 0.0
  %808 = vmatpush1.xpose.msra.mxu0 0.0
  %809 = vmatprep.subr.mxu0 0.0
  %810 = vmatpush1.xpose.msra.mxu0 0.0
  %811 = vmatprep.subr.mxu0 0.0
  %812 = vmatpush1.xpose.msra.mxu0 0.0
  %813 = vmatprep.subr.mxu0 0.0
  %814 = vmatpush1.xpose.msra.mxu0 0.0
  %815 = vmatprep.subr.mxu0 0.0
  %816 = vmatpush1.xpose.msra.mxu0 0.0
  %817 = vmatprep.subr.mxu0 0.0
  %818 = vmatpush1.xpose.msra.mxu0 0.0
  %819 = vmatprep.subr.mxu0 0.0
  %820 = vmatpush1.xpose.msra.mxu0 0.0
  %821 = vmatprep.subr.mxu0 0.0
  %822 = vmatpush1.xpose.msra.mxu0 0.0
  %823 = vmatprep.subr.mxu0 0.0
  %824 = vmatpush1.xpose.msra.mxu0 0.0
  %825 = vmatprep.subr.mxu0 0.0
  %826 = vmatpush1.xpose.msra.mxu0 0.0
  %827 = vmatprep.subr.mxu0 0.0
  %828 = vmatpush1.xpose.msra.mxu0 0.0
  %829 = vmatprep.subr.mxu0 0.0
  %830 = vmatpush1.xpose.msra.mxu0 0.0
  %831 = vmatprep.subr.mxu0 0.0
  %832 = vmatpush1.xpose.msra.mxu0 0.0
  %833 = vmatprep.subr.mxu0 0.0
  %834 = vmatpush1.xpose.msra.mxu0 0.0
  %835 = vmatprep.subr.mxu0 0.0
  %836 = vmatpush1.xpose.msra.mxu0 0.0
  %837 = vmatprep.subr.mxu0 0.0
  %838 = vmatpush1.xpose.msra.mxu0 0.0
  %839 = vmatprep.subr.mxu0 0.0
  %840 = vmatpush1.xpose.msra.mxu0 0.0
  %841 = vmatprep.subr.mxu0 0.0
  %842 = vmatpush1.xpose.msra.mxu0 0.0
  %843 = vmatprep.subr.mxu0 0.0
  %844 = vmatpush1.xpose.msra.mxu0 0.0
  %845 = vmatprep.subr.mxu0 0.0
  %846 = vmatpush1.xpose.msra.mxu0 0.0
  %847 = vmatprep.subr.mxu0 0.0
  %848 = vmatpush1.xpose.msra.mxu0 0.0
  %849 = vmatprep.subr.mxu0 0.0
  %850 = vmatpush1.xpose.msra.mxu0 0.0
  %851 = vmatprep.mubr.f32.mxu0 0.0
  %852 = vmatmul.mubr.f32.gmra.mrb[0].mxu0 %v782
  %v853 = vpop.f32.mrb[0].mxu0
  %v854 = vadd.f32 0.0, %v853
  %v855 = vpop.f32.mrb[0].mxu0
  %856 = vdwg.mxu0
  %857 = vst.msk [vmem:[#allocation2 + $0x10] sm:$0xff] %vm310, %v854
  %858 = vxpose.xlu0.b32.start [1/16] %v235, 128
  %859 = vxpose.xlu0.b32.cont [2/16] 0.0, 128
  %860 = vxpose.xlu0.b32.cont [3/16] 0.0, 128
  %861 = vxpose.xlu0.b32.cont [4/16] 0.0, 128
  %862 = vxpose.xlu0.b32.cont [5/16] 0.0, 128
  %863 = vxpose.xlu0.b32.cont [6/16] 0.0, 128
  %864 = vxpose.xlu0.b32.cont [7/16] 0.0, 128
  %865 = vxpose.xlu0.b32.cont [8/16] 0.0, 128
  %866 = vxpose.xlu0.b32.cont [9/16] 0.0, 128
  %867 = vxpose.xlu0.b32.cont [10/16] 0.0, 128
  %868 = vxpose.xlu0.b32.cont [11/16] 0.0, 128
  %869 = vxpose.xlu0.b32.cont [12/16] 0.0, 128
  %870 = vxpose.xlu0.b32.cont [13/16] 0.0, 128
  %871 = vxpose.xlu0.b32.cont [14/16] 0.0, 128
  %872 = vxpose.xlu0.b32.cont [15/16] 0.0, 128
  %873 = vxpose.xlu0.b32.end [16/16] 0.0, 128
  %v874 = vpop.trf.xlu0
  %v875 = vpop.trf.xlu0
  %v876 = vpop.trf.xlu0
  %v877 = vpop.trf.xlu0
  %v878 = vpop.trf.xlu0
  %v879 = vpop.trf.xlu0
  %v880 = vpop.trf.xlu0
  %v881 = vpop.trf.xlu0
  %v882 = vpop.trf.xlu0
  %v883 = vpop.trf.xlu0
  %v884 = vpop.trf.xlu0
  %v885 = vpop.trf.xlu0
  %v886 = vpop.trf.xlu0
  %v887 = vpop.trf.xlu0
  %v888 = vpop.trf.xlu0
  %v889 = vpop.trf.xlu0
  %v891 = vsel %vm310, %v874, 0
  %893 = vmatprep.subr.mxu0 0.0
  %894 = vmatpush1.msra.mxu0 %v255
  %895 = vmatprep.subr.mxu0 0.0
  %896 = vmatpush1.msra.mxu0 0.0
  %897 = vmatprep.subr.mxu0 0.0
  %898 = vmatpush1.msra.mxu0 0.0
  %899 = vmatprep.subr.mxu0 0.0
  %900 = vmatpush1.msra.mxu0 0.0
  %901 = vmatprep.subr.mxu0 0.0
  %902 = vmatpush1.msra.mxu0 0.0
  %903 = vmatprep.subr.mxu0 0.0
  %904 = vmatpush1.msra.mxu0 0.0
  %905 = vmatprep.subr.mxu0 0.0
  %906 = vmatpush1.msra.mxu0 0.0
  %907 = vmatprep.subr.mxu0 0.0
  %908 = vmatpush1.msra.mxu0 0.0
  %909 = vmatprep.subr.mxu0 0.0
  %910 = vmatpush1.msra.mxu0 0.0
  %911 = vmatprep.subr.mxu0 0.0
  %912 = vmatpush1.msra.mxu0 0.0
  %913 = vmatprep.subr.mxu0 0.0
  %914 = vmatpush1.msra.mxu0 0.0
  %915 = vmatprep.subr.mxu0 0.0
  %916 = vmatpush1.msra.mxu0 0.0
  %917 = vmatprep.subr.mxu0 0.0
  %918 = vmatpush1.msra.mxu0 0.0
  %919 = vmatprep.subr.mxu0 0.0
  %920 = vmatpush1.msra.mxu0 0.0
  %921 = vmatprep.subr.mxu0 0.0
  %922 = vmatpush1.msra.mxu0 0.0
  %923 = vmatprep.subr.mxu0 0.0
  %924 = vmatpush1.msra.mxu0 0.0
  %925 = vmatprep.subr.mxu0 0.0
  %926 = vmatpush1.msra.mxu0 0.0
  %927 = vmatprep.subr.mxu0 0.0
  %928 = vmatpush1.msra.mxu0 0.0
  %929 = vmatprep.subr.mxu0 0.0
  %930 = vmatpush1.msra.mxu0 0.0
  %931 = vmatprep.subr.mxu0 0.0
  %932 = vmatpush1.msra.mxu0 0.0
  %933 = vmatprep.subr.mxu0 0.0
  %934 = vmatpush1.msra.mxu0 0.0
  %935 = vmatprep.subr.mxu0 0.0
  %936 = vmatpush1.msra.mxu0 0.0
  %937 = vmatprep.subr.mxu0 0.0
  %938 = vmatpush1.msra.mxu0 0.0
  %939 = vmatprep.subr.mxu0 0.0
  %940 = vmatpush1.msra.mxu0 0.0
  %941 = vmatprep.subr.mxu0 0.0
  %942 = vmatpush1.msra.mxu0 0.0
  %943 = vmatprep.subr.mxu0 0.0
  %944 = vmatpush1.msra.mxu0 0.0
  %945 = vmatprep.subr.mxu0 0.0
  %946 = vmatpush1.msra.mxu0 0.0
  %947 = vmatprep.subr.mxu0 0.0
  %948 = vmatpush1.msra.mxu0 0.0
  %949 = vmatprep.subr.mxu0 0.0
  %950 = vmatpush1.msra.mxu0 0.0
  %951 = vmatprep.subr.mxu0 0.0
  %952 = vmatpush1.msra.mxu0 0.0
  %953 = vmatprep.subr.mxu0 0.0
  %954 = vmatpush1.msra.mxu0 0.0
  %955 = vmatprep.subr.mxu0 0.0
  %956 = vmatpush1.msra.mxu0 0.0
  %957 = vmatprep.mubr.f32.mxu0 0.0
  %958 = vmatmul.mubr.f32.gmra.mrb[0].mxu0 %v891
  %v959 = vpop.f32.mrb[0].mxu0
  %v960 = vadd.f32 0.0, %v959
  %v961 = vpop.f32.mrb[0].mxu0
  %962 = vdwg.mxu0
  %v963 = vsel %vm310, %v960, -inf
  %964 = vmax.xlane.f32.xlu0 %v963
  %v965 = vpop.xlane.xlu0 %964
  %v966 = vsub.f32 %v960, %v965
  %v967 = vmul.f32 %v966, 1.442695
  %v968 = vpow.pop %v967
  %v969 = vsel %vm310, %v968, 0.0
  %970 = vadd.xlane.f32.xlu0 %v969
  %v971 = vpop.xlane.xlu0 %970
  %v972 = vrcp.pop %v971
  %v973 = vmul.f32 %v968, %v972
  %v975 = vsel %vm310, %v275, 0
  %v978 = vsel %vm310, %v973, 0
  %980 = vmatprep.subr.mxu0 0.0
  %981 = vmatpush1.xpose.msra.mxu0 %v978
  %982 = vmatprep.subr.mxu0 0.0
  %983 = vmatpush1.xpose.msra.mxu0 0.0
  %984 = vmatprep.subr.mxu0 0.0
  %985 = vmatpush1.xpose.msra.mxu0 0.0
  %986 = vmatprep.subr.mxu0 0.0
  %987 = vmatpush1.xpose.msra.mxu0 0.0
  %988 = vmatprep.subr.mxu0 0.0
  %989 = vmatpush1.xpose.msra.mxu0 0.0
  %990 = vmatprep.subr.mxu0 0.0
  %991 = vmatpush1.xpose.msra.mxu0 0.0
  %992 = vmatprep.subr.mxu0 0.0
  %993 = vmatpush1.xpose.msra.mxu0 0.0
  %994 = vmatprep.subr.mxu0 0.0
  %995 = vmatpush1.xpose.msra.mxu0 0.0
  %996 = vmatprep.subr.mxu0 0.0
  %997 = vmatpush1.xpose.msra.mxu0 0.0
  %998 = vmatprep.subr.mxu0 0.0
  %999 = vmatpush1.xpose.msra.mxu0 0.0
  %1000 = vmatprep.subr.mxu0 0.0
  %1001 = vmatpush1.xpose.msra.mxu0 0.0
  %1002 = vmatprep.subr.mxu0 0.0
  %1003 = vmatpush1.xpose.msra.mxu0 0.0
  %1004 = vmatprep.subr.mxu0 0.0
  %1005 = vmatpush1.xpose.msra.mxu0 0.0
  %1006 = vmatprep.subr.mxu0 0.0
  %1007 = vmatpush1.xpose.msra.mxu0 0.0
  %1008 = vmatprep.subr.mxu0 0.0
  %1009 = vmatpush1.xpose.msra.mxu0 0.0
  %1010 = vmatprep.subr.mxu0 0.0
  %1011 = vmatpush1.xpose.msra.mxu0 0.0
  %1012 = vmatprep.subr.mxu0 0.0
  %1013 = vmatpush1.xpose.msra.mxu0 0.0
  %1014 = vmatprep.subr.mxu0 0.0
  %1015 = vmatpush1.xpose.msra.mxu0 0.0
  %1016 = vmatprep.subr.mxu0 0.0
  %1017 = vmatpush1.xpose.msra.mxu0 0.0
  %1018 = vmatprep.subr.mxu0 0.0
  %1019 = vmatpush1.xpose.msra.mxu0 0.0
  %1020 = vmatprep.subr.mxu0 0.0
  %1021 = vmatpush1.xpose.msra.mxu0 0.0
  %1022 = vmatprep.subr.mxu0 0.0
  %1023 = vmatpush1.xpose.msra.mxu0 0.0
  %1024 = vmatprep.subr.mxu0 0.0
  %1025 = vmatpush1.xpose.msra.mxu0 0.0
  %1026 = vmatprep.subr.mxu0 0.0
  %1027 = vmatpush1.xpose.msra.mxu0 0.0
  %1028 = vmatprep.subr.mxu0 0.0
  %1029 = vmatpush1.xpose.msra.mxu0 0.0
  %1030 = vmatprep.subr.mxu0 0.0
  %1031 = vmatpush1.xpose.msra.mxu0 0.0
  %1032 = vmatprep.subr.mxu0 0.0
  %1033 = vmatpush1.xpose.msra.mxu0 0.0
  %1034 = vmatprep.subr.mxu0 0.0
  %1035 = vmatpush1.xpose.msra.mxu0 0.0
  %1036 = vmatprep.subr.mxu0 0.0
  %1037 = vmatpush1.xpose.msra.mxu0 0.0
  %1038 = vmatprep.subr.mxu0 0.0
  %1039 = vmatpush1.xpose.msra.mxu0 0.0
  %1040 = vmatprep.subr.mxu0 0.0
  %1041 = vmatpush1.xpose.msra.mxu0 0.0
  %1042 = vmatprep.subr.mxu0 0.0
  %1043 = vmatpush1.xpose.msra.mxu0 0.0
  %1044 = vmatprep.mubr.f32.mxu0 0.0
  %1045 = vmatmul.mubr.f32.gmra.mrb[0].mxu0 %v975
  %v1046 = vpop.f32.mrb[0].mxu0
  %v1047 = vadd.f32 0.0, %v1046
  %v1048 = vpop.f32.mrb[0].mxu0
  %1049 = vdwg.mxu0
  %1050 = vst.msk [vmem:[#allocation2 + $0x18] sm:$0xff] %vm310, %v1047
  %v1051 = vld [vmem:[#allocation2] sm:$0xff]
  %v1052 = vld [vmem:[#allocation2 + $0x8] sm:$0xff]
  %v1053 = vld [vmem:[#allocation2 + $0x10] sm:$0xff]
  %v1054 = vld [vmem:[#allocation2 + $0x18] sm:$0xff]
  %1056 = vset.pattern.permute.xlu0 0
  %1057 = vperm.xlu0 %1056, %v48
  %v1058 = vpop.permute.xlu0 %1057
  %1061 = vset.pattern.permute.xlu0 0
  %1062 = vperm.xlu0 %1061, %v49
  %v1063 = vpop.permute.xlu0 %1062
  %1066 = vset.pattern.permute.xlu0 0
  %1067 = vperm.xlu0 %1066, %v50
  %v1068 = vpop.permute.xlu0 %1067
  %1071 = vset.pattern.permute.xlu0 0
  %1072 = vperm.xlu0 %1071, %v51
  %v1073 = vpop.permute.xlu0 %1072
  %v1076 = vsel %vm116, %v32, 0
  %v1079 = vsel %vm116, %v33, 0
  %v1082 = vsel %vm116, %v34, 0
  %v1085 = vsel %vm116, %v35, 0
  %1087 = vmatprep.subr.mxu0 0.0
  %1088 = vmatpush1.msra.mxu0 %v1051
  %1089 = vmatprep.subr.mxu0 0.0
  %1090 = vmatpush1.msra.mxu0 %v1052
  %1091 = vmatprep.subr.mxu0 0.0
  %1092 = vmatpush1.msra.mxu0 %v1053
  %1093 = vmatprep.subr.mxu0 0.0
  %1094 = vmatpush1.msra.mxu0 %v1054
  %1095 = vmatprep.subr.mxu0 0.0
  %1096 = vmatpush1.msra.mxu0 0.0
  %1097 = vmatprep.subr.mxu0 0.0
  %1098 = vmatpush1.msra.mxu0 0.0
  %1099 = vmatprep.subr.mxu0 0.0
  %1100 = vmatpush1.msra.mxu0 0.0
  %1101 = vmatprep.subr.mxu0 0.0
  %1102 = vmatpush1.msra.mxu0 0.0
  %1103 = vmatprep.subr.mxu0 0.0
  %1104 = vmatpush1.msra.mxu0 0.0
  %1105 = vmatprep.subr.mxu0 0.0
  %1106 = vmatpush1.msra.mxu0 0.0
  %1107 = vmatprep.subr.mxu0 0.0
  %1108 = vmatpush1.msra.mxu0 0.0
  %1109 = vmatprep.subr.mxu0 0.0
  %1110 = vmatpush1.msra.mxu0 0.0
  %1111 = vmatprep.subr.mxu0 0.0
  %1112 = vmatpush1.msra.mxu0 0.0
  %1113 = vmatprep.subr.mxu0 0.0
  %1114 = vmatpush1.msra.mxu0 0.0
  %1115 = vmatprep.subr.mxu0 0.0
  %1116 = vmatpush1.msra.mxu0 0.0
  %1117 = vmatprep.subr.mxu0 0.0
  %1118 = vmatpush1.msra.mxu0 0.0
  %1119 = vmatprep.subr.mxu0 0.0
  %1120 = vmatpush1.msra.mxu0 0.0
  %1121 = vmatprep.subr.mxu0 0.0
  %1122 = vmatpush1.msra.mxu0 0.0
  %1123 = vmatprep.subr.mxu0 0.0
  %1124 = vmatpush1.msra.mxu0 0.0
  %1125 = vmatprep.subr.mxu0 0.0
  %1126 = vmatpush1.msra.mxu0 0.0
  %1127 = vmatprep.subr.mxu0 0.0
  %1128 = vmatpush1.msra.mxu0 0.0
  %1129 = vmatprep.subr.mxu0 0.0
  %1130 = vmatpush1.msra.mxu0 0.0
  %1131 = vmatprep.subr.mxu0 0.0
  %1132 = vmatpush1.msra.mxu0 0.0
  %1133 = vmatprep.subr.mxu0 0.0
  %1134 = vmatpush1.msra.mxu0 0.0
  %1135 = vmatprep.subr.mxu0 0.0
  %1136 = vmatpush1.msra.mxu0 0.0
  %1137 = vmatprep.subr.mxu0 0.0
  %1138 = vmatpush1.msra.mxu0 0.0
  %1139 = vmatprep.subr.mxu0 0.0
  %1140 = vmatpush1.msra.mxu0 0.0
  %1141 = vmatprep.subr.mxu0 0.0
  %1142 = vmatpush1.msra.mxu0 0.0
  %1143 = vmatprep.subr.mxu0 0.0
  %1144 = vmatpush1.msra.mxu0 0.0
  %1145 = vmatprep.subr.mxu0 0.0
  %1146 = vmatpush1.msra.mxu0 0.0
  %1147 = vmatprep.subr.mxu0 0.0
  %1148 = vmatpush1.msra.mxu0 0.0
  %1149 = vmatprep.subr.mxu0 0.0
  %1150 = vmatpush1.msra.mxu0 0.0
  %1151 = vmatprep.mubr.f32.mxu0 0.0
  %1152 = vmatmul.mubr.f32.gmra.mrb[0].mxu0 %v1076
  %v1153 = vpop.f32.mrb[0].mxu0
  %v1154 = vadd.f32 %v1058, %v1153
  %v1155 = vpop.f32.mrb[0].mxu0
  %1156 = vmatprep.mubr.f32.mxu0 0.0
  %1157 = vmatmul.mubr.f32.gmra.mrb[0].mxu0 %v1079
  %v1158 = vpop.f32.mrb[0].mxu0
  %v1159 = vadd.f32 %v1063, %v1158
  %v1160 = vpop.f32.mrb[0].mxu0
  %1161 = vmatprep.mubr.f32.mxu0 0.0
  %1162 = vmatmul.mubr.f32.gmra.mrb[0].mxu0 %v1082
  %v1163 = vpop.f32.mrb[0].mxu0
  %v1164 = vadd.f32 %v1068, %v1163
  %v1165 = vpop.f32.mrb[0].mxu0
  %1166 = vmatprep.mubr.f32.mxu0 0.0
  %1167 = vmatmul.mubr.f32.gmra.mrb[0].mxu0 %v1085
  %v1168 = vpop.f32.mrb[0].mxu0
  %v1169 = vadd.f32 %v1073, %v1168
  %v1170 = vpop.f32.mrb[0].mxu0
  %1171 = vdwg.mxu0
  %1172 = vst.msk [vmem:[%s5] sm:$0xff] %vm310, %v1154
  %1173 = vst.msk [vmem:[%s5 + $0x8] sm:$0xff] %vm310, %v1159
  %1174 = vst.msk [vmem:[%s5 + $0x10] sm:$0xff] %vm310, %v1164
  %1175 = vst.msk [vmem:[%s5 + $0x18] sm:$0xff] %vm310, %v1169
  %s1176 = scalar_lea.vmem %s0, 32
  %v1177 = vld [vmem:[%s1176] sm:$0xff]
  %v1178 = vld [vmem:[%s1176 + $0x8] sm:$0xff]
  %v1179 = vld [vmem:[%s1176 + $0x10] sm:$0xff]
  %v1180 = vld [vmem:[%s1176 + $0x18] sm:$0xff]
  %1181 = vmatprep.subr.mxu0 0.0
  %1182 = vmatpush1.msra.mxu0 %v1177
  %1183 = vmatprep.subr.mxu0 0.0
  %1184 = vmatpush1.msra.mxu0 %v1178
  %1185 = vmatprep.subr.mxu0 0.0
  %1186 = vmatpush1.msra.mxu0 %v1179
  %1187 = vmatprep.subr.mxu0 0.0
  %1188 = vmatpush1.msra.mxu0 %v1180
  %1189 = vmatprep.subr.mxu0 0.0
  %1190 = vmatpush1.msra.mxu0 0.0
  %1191 = vmatprep.subr.mxu0 0.0
  %1192 = vmatpush1.msra.mxu0 0.0
  %1193 = vmatprep.subr.mxu0 0.0
  %1194 = vmatpush1.msra.mxu0 0.0
  %1195 = vmatprep.subr.mxu0 0.0
  %1196 = vmatpush1.msra.mxu0 0.0
  %1197 = vmatprep.subr.mxu0 0.0
  %1198 = vmatpush1.msra.mxu0 0.0
  %1199 = vmatprep.subr.mxu0 0.0
  %1200 = vmatpush1.msra.mxu0 0.0
  %1201 = vmatprep.subr.mxu0 0.0
  %1202 = vmatpush1.msra.mxu0 0.0
  %1203 = vmatprep.subr.mxu0 0.0
  %1204 = vmatpush1.msra.mxu0 0.0
  %1205 = vmatprep.subr.mxu0 0.0
  %1206 = vmatpush1.msra.mxu0 0.0
  %1207 = vmatprep.subr.mxu0 0.0
  %1208 = vmatpush1.msra.mxu0 0.0
  %1209 = vmatprep.subr.mxu0 0.0
  %1210 = vmatpush1.msra.mxu0 0.0
  %1211 = vmatprep.subr.mxu0 0.0
  %1212 = vmatpush1.msra.mxu0 0.0
  %1213 = vmatprep.subr.mxu0 0.0
  %1214 = vmatpush1.msra.mxu0 0.0
  %1215 = vmatprep.subr.mxu0 0.0
  %1216 = vmatpush1.msra.mxu0 0.0
  %1217 = vmatprep.subr.mxu0 0.0
  %1218 = vmatpush1.msra.mxu0 0.0
  %1219 = vmatprep.subr.mxu0 0.0
  %1220 = vmatpush1.msra.mxu0 0.0
  %1221 = vmatprep.subr.mxu0 0.0
  %1222 = vmatpush1.msra.mxu0 0.0
  %1223 = vmatprep.subr.mxu0 0.0
  %1224 = vmatpush1.msra.mxu0 0.0
  %1225 = vmatprep.subr.mxu0 0.0
  %1226 = vmatpush1.msra.mxu0 0.0
  %1227 = vmatprep.subr.mxu0 0.0
  %1228 = vmatpush1.msra.mxu0 0.0
  %1229 = vmatprep.subr.mxu0 0.0
  %1230 = vmatpush1.msra.mxu0 0.0
  %1231 = vmatprep.subr.mxu0 0.0
  %1232 = vmatpush1.msra.mxu0 0.0
  %1233 = vmatprep.subr.mxu0 0.0
  %1234 = vmatpush1.msra.mxu0 0.0
  %1235 = vmatprep.subr.mxu0 0.0
  %1236 = vmatpush1.msra.mxu0 0.0
  %1237 = vmatprep.subr.mxu0 0.0
  %1238 = vmatpush1.msra.mxu0 0.0
  %1239 = vmatprep.subr.mxu0 0.0
  %1240 = vmatpush1.msra.mxu0 0.0
  %1241 = vmatprep.subr.mxu0 0.0
  %1242 = vmatpush1.msra.mxu0 0.0
  %1243 = vmatprep.subr.mxu0 0.0
  %1244 = vmatpush1.msra.mxu0 0.0
  %1245 = vmatprep.mubr.f32.mxu0 0.0
  %1246 = vmatmul.mubr.f32.gmra.mrb[0].mxu0 %v118
  %v1247 = vpop.f32.mrb[0].mxu0
  %v1248 = vadd.f32 %v59, %v1247
  %v1249 = vpop.f32.mrb[0].mxu0
  %1250 = vmatprep.mubr.f32.mxu0 0.0
  %1251 = vmatmul.mubr.f32.gmra.mrb[0].mxu0 %v121
  %v1252 = vpop.f32.mrb[0].mxu0
  %v1253 = vadd.f32 %v64, %v1252
  %v1254 = vpop.f32.mrb[0].mxu0
  %1255 = vmatprep.mubr.f32.mxu0 0.0
  %1256 = vmatmul.mubr.f32.gmra.mrb[0].mxu0 %v124
  %v1257 = vpop.f32.mrb[0].mxu0
  %v1258 = vadd.f32 %v69, %v1257
  %v1259 = vpop.f32.mrb[0].mxu0
  %1260 = vmatprep.mubr.f32.mxu0 0.0
  %1261 = vmatmul.mubr.f32.gmra.mrb[0].mxu0 %v127
  %v1262 = vpop.f32.mrb[0].mxu0
  %v1263 = vadd.f32 %v74, %v1262
  %v1264 = vpop.f32.mrb[0].mxu0
  %1265 = vmatprep.mubr.f32.mxu0 0.0
  %1266 = vmatmul.mubr.f32.gmra.mrb[0].mxu0 %v130
  %v1267 = vpop.f32.mrb[0].mxu0
  %v1268 = vadd.f32 %v79, %v1267
  %v1269 = vpop.f32.mrb[0].mxu0
  %1270 = vmatprep.mubr.f32.mxu0 0.0
  %1271 = vmatmul.mubr.f32.gmra.mrb[0].mxu0 %v133
  %v1272 = vpop.f32.mrb[0].mxu0
  %v1273 = vadd.f32 %v84, %v1272
  %v1274 = vpop.f32.mrb[0].mxu0
  %1275 = vmatprep.mubr.f32.mxu0 0.0
  %1276 = vmatmul.mubr.f32.gmra.mrb[0].mxu0 %v136
  %v1277 = vpop.f32.mrb[0].mxu0
  %v1278 = vadd.f32 %v89, %v1277
  %v1279 = vpop.f32.mrb[0].mxu0
  %1280 = vmatprep.mubr.f32.mxu0 0.0
  %1281 = vmatmul.mubr.f32.gmra.mrb[0].mxu0 %v139
  %v1282 = vpop.f32.mrb[0].mxu0
  %v1283 = vadd.f32 %v94, %v1282
  %v1284 = vpop.f32.mrb[0].mxu0
  %1285 = vmatprep.mubr.f32.mxu0 0.0
  %1286 = vmatmul.mubr.f32.gmra.mrb[0].mxu0 %v142
  %v1287 = vpop.f32.mrb[0].mxu0
  %v1288 = vadd.f32 %v99, %v1287
  %v1289 = vpop.f32.mrb[0].mxu0
  %1290 = vmatprep.mubr.f32.mxu0 0.0
  %1291 = vmatmul.mubr.f32.gmra.mrb[0].mxu0 %v145
  %v1292 = vpop.f32.mrb[0].mxu0
  %v1293 = vadd.f32 %v104, %v1292
  %v1294 = vpop.f32.mrb[0].mxu0
  %1295 = vmatprep.mubr.f32.mxu0 0.0
  %1296 = vmatmul.mubr.f32.gmra.mrb[0].mxu0 %v148
  %v1297 = vpop.f32.mrb[0].mxu0
  %v1298 = vadd.f32 %v109, %v1297
  %v1299 = vpop.f32.mrb[0].mxu0
  %1300 = vmatprep.mubr.f32.mxu0 0.0
  %1301 = vmatmul.mubr.f32.gmra.mrb[0].mxu0 %v151
  %v1302 = vpop.f32.mrb[0].mxu0
  %v1303 = vadd.f32 %v114, %v1302
  %v1304 = vpop.f32.mrb[0].mxu0
  %1305 = vdwg.mxu0
  %1306 = vxpose.xlu0.b32.start [1/16] %v1248, 128
  %1307 = vxpose.xlu0.b32.cont [2/16] 0.0, 128
  %1308 = vxpose.xlu0.b32.cont [3/16] 0.0, 128
  %1309 = vxpose.xlu0.b32.cont [4/16] 0.0, 128
  %1310 = vxpose.xlu0.b32.cont [5/16] 0.0, 128
  %1311 = vxpose.xlu0.b32.cont [6/16] 0.0, 128
  %1312 = vxpose.xlu0.b32.cont [7/16] 0.0, 128
  %1313 = vxpose.xlu0.b32.cont [8/16] 0.0, 128
  %1314 = vxpose.xlu0.b32.cont [9/16] 0.0, 128
  %1315 = vxpose.xlu0.b32.cont [10/16] 0.0, 128
  %1316 = vxpose.xlu0.b32.cont [11/16] 0.0, 128
  %1317 = vxpose.xlu0.b32.cont [12/16] 0.0, 128
  %1318 = vxpose.xlu0.b32.cont [13/16] 0.0, 128
  %1319 = vxpose.xlu0.b32.cont [14/16] 0.0, 128
  %1320 = vxpose.xlu0.b32.cont [15/16] 0.0, 128
  %1321 = vxpose.xlu0.b32.end [16/16] 0.0, 128
  %v1322 = vpop.trf.xlu0
  %v1323 = vpop.trf.xlu0
  %v1324 = vpop.trf.xlu0
  %v1325 = vpop.trf.xlu0
  %v1326 = vpop.trf.xlu0
  %v1327 = vpop.trf.xlu0
  %v1328 = vpop.trf.xlu0
  %v1329 = vpop.trf.xlu0
  %v1330 = vpop.trf.xlu0
  %v1331 = vpop.trf.xlu0
  %v1332 = vpop.trf.xlu0
  %v1333 = vpop.trf.xlu0
  %v1334 = vpop.trf.xlu0
  %v1335 = vpop.trf.xlu0
  %v1336 = vpop.trf.xlu0
  %v1337 = vpop.trf.xlu0
  %v1339 = vsel %vm310, %v1322, 0
  %1341 = vmatprep.subr.mxu0 0.0
  %1342 = vmatpush1.msra.mxu0 %v1268
  %1343 = vmatprep.subr.mxu0 0.0
  %1344 = vmatpush1.msra.mxu0 0.0
  %1345 = vmatprep.subr.mxu0 0.0
  %1346 = vmatpush1.msra.mxu0 0.0
  %1347 = vmatprep.subr.mxu0 0.0
  %1348 = vmatpush1.msra.mxu0 0.0
  %1349 = vmatprep.subr.mxu0 0.0
  %1350 = vmatpush1.msra.mxu0 0.0
  %1351 = vmatprep.subr.mxu0 0.0
  %1352 = vmatpush1.msra.mxu0 0.0
  %1353 = vmatprep.subr.mxu0 0.0
  %1354 = vmatpush1.msra.mxu0 0.0
  %1355 = vmatprep.subr.mxu0 0.0
  %1356 = vmatpush1.msra.mxu0 0.0
  %1357 = vmatprep.subr.mxu0 0.0
  %1358 = vmatpush1.msra.mxu0 0.0
  %1359 = vmatprep.subr.mxu0 0.0
  %1360 = vmatpush1.msra.mxu0 0.0
  %1361 = vmatprep.subr.mxu0 0.0
  %1362 = vmatpush1.msra.mxu0 0.0
  %1363 = vmatprep.subr.mxu0 0.0
  %1364 = vmatpush1.msra.mxu0 0.0
  %1365 = vmatprep.subr.mxu0 0.0
  %1366 = vmatpush1.msra.mxu0 0.0
  %1367 = vmatprep.subr.mxu0 0.0
  %1368 = vmatpush1.msra.mxu0 0.0
  %1369 = vmatprep.subr.mxu0 0.0
  %1370 = vmatpush1.msra.mxu0 0.0
  %1371 = vmatprep.subr.mxu0 0.0
  %1372 = vmatpush1.msra.mxu0 0.0
  %1373 = vmatprep.subr.mxu0 0.0
  %1374 = vmatpush1.msra.mxu0 0.0
  %1375 = vmatprep.subr.mxu0 0.0
  %1376 = vmatpush1.msra.mxu0 0.0
  %1377 = vmatprep.subr.mxu0 0.0
  %1378 = vmatpush1.msra.mxu0 0.0
  %1379 = vmatprep.subr.mxu0 0.0
  %1380 = vmatpush1.msra.mxu0 0.0
  %1381 = vmatprep.subr.mxu0 0.0
  %1382 = vmatpush1.msra.mxu0 0.0
  %1383 = vmatprep.subr.mxu0 0.0
  %1384 = vmatpush1.msra.mxu0 0.0
  %1385 = vmatprep.subr.mxu0 0.0
  %1386 = vmatpush1.msra.mxu0 0.0
  %1387 = vmatprep.subr.mxu0 0.0
  %1388 = vmatpush1.msra.mxu0 0.0
  %1389 = vmatprep.subr.mxu0 0.0
  %1390 = vmatpush1.msra.mxu0 0.0
  %1391 = vmatprep.subr.mxu0 0.0
  %1392 = vmatpush1.msra.mxu0 0.0
  %1393 = vmatprep.subr.mxu0 0.0
  %1394 = vmatpush1.msra.mxu0 0.0
  %1395 = vmatprep.subr.mxu0 0.0
  %1396 = vmatpush1.msra.mxu0 0.0
  %1397 = vmatprep.subr.mxu0 0.0
  %1398 = vmatpush1.msra.mxu0 0.0
  %1399 = vmatprep.subr.mxu0 0.0
  %1400 = vmatpush1.msra.mxu0 0.0
  %1401 = vmatprep.subr.mxu0 0.0
  %1402 = vmatpush1.msra.mxu0 0.0
  %1403 = vmatprep.subr.mxu0 0.0
  %1404 = vmatpush1.msra.mxu0 0.0
  %1405 = vmatprep.mubr.f32.mxu0 0.0
  %1406 = vmatmul.mubr.f32.gmra.mrb[0].mxu0 %v1339
  %v1407 = vpop.f32.mrb[0].mxu0
  %v1408 = vadd.f32 0.0, %v1407
  %v1409 = vpop.f32.mrb[0].mxu0
  %1410 = vdwg.mxu0
  %v1411 = vsel %vm310, %v1408, -inf
  %1412 = vmax.xlane.f32.xlu0 %v1411
  %v1413 = vpop.xlane.xlu0 %1412
  %v1414 = vsub.f32 %v1408, %v1413
  %v1415 = vmul.f32 %v1414, 1.442695
  %v1416 = vpow.pop %v1415
  %v1417 = vsel %vm310, %v1416, 0.0
  %1418 = vadd.xlane.f32.xlu0 %v1417
  %v1419 = vpop.xlane.xlu0 %1418
  %v1420 = vrcp.pop %v1419
  %v1421 = vmul.f32 %v1416, %v1420
  %v1423 = vsel %vm310, %v1288, 0
  %v1426 = vsel %vm310, %v1421, 0
  %1428 = vmatprep.subr.mxu0 0.0
  %1429 = vmatpush1.xpose.msra.mxu0 %v1426
  %1430 = vmatprep.subr.mxu0 0.0
  %1431 = vmatpush1.xpose.msra.mxu0 0.0
  %1432 = vmatprep.subr.mxu0 0.0
  %1433 = vmatpush1.xpose.msra.mxu0 0.0
  %1434 = vmatprep.subr.mxu0 0.0
  %1435 = vmatpush1.xpose.msra.mxu0 0.0
  %1436 = vmatprep.subr.mxu0 0.0
  %1437 = vmatpush1.xpose.msra.mxu0 0.0
  %1438 = vmatprep.subr.mxu0 0.0
  %1439 = vmatpush1.xpose.msra.mxu0 0.0
  %1440 = vmatprep.subr.mxu0 0.0
  %1441 = vmatpush1.xpose.msra.mxu0 0.0
  %1442 = vmatprep.subr.mxu0 0.0
  %1443 = vmatpush1.xpose.msra.mxu0 0.0
  %1444 = vmatprep.subr.mxu0 0.0
  %1445 = vmatpush1.xpose.msra.mxu0 0.0
  %1446 = vmatprep.subr.mxu0 0.0
  %1447 = vmatpush1.xpose.msra.mxu0 0.0
  %1448 = vmatprep.subr.mxu0 0.0
  %1449 = vmatpush1.xpose.msra.mxu0 0.0
  %1450 = vmatprep.subr.mxu0 0.0
  %1451 = vmatpush1.xpose.msra.mxu0 0.0
  %1452 = vmatprep.subr.mxu0 0.0
  %1453 = vmatpush1.xpose.msra.mxu0 0.0
  %1454 = vmatprep.subr.mxu0 0.0
  %1455 = vmatpush1.xpose.msra.mxu0 0.0
  %1456 = vmatprep.subr.mxu0 0.0
  %1457 = vmatpush1.xpose.msra.mxu0 0.0
  %1458 = vmatprep.subr.mxu0 0.0
  %1459 = vmatpush1.xpose.msra.mxu0 0.0
  %1460 = vmatprep.subr.mxu0 0.0
  %1461 = vmatpush1.xpose.msra.mxu0 0.0
  %1462 = vmatprep.subr.mxu0 0.0
  %1463 = vmatpush1.xpose.msra.mxu0 0.0
  %1464 = vmatprep.subr.mxu0 0.0
  %1465 = vmatpush1.xpose.msra.mxu0 0.0
  %1466 = vmatprep.subr.mxu0 0.0
  %1467 = vmatpush1.xpose.msra.mxu0 0.0
  %1468 = vmatprep.subr.mxu0 0.0
  %1469 = vmatpush1.xpose.msra.mxu0 0.0
  %1470 = vmatprep.subr.mxu0 0.0
  %1471 = vmatpush1.xpose.msra.mxu0 0.0
  %1472 = vmatprep.subr.mxu0 0.0
  %1473 = vmatpush1.xpose.msra.mxu0 0.0
  %1474 = vmatprep.subr.mxu0 0.0
  %1475 = vmatpush1.xpose.msra.mxu0 0.0
  %1476 = vmatprep.subr.mxu0 0.0
  %1477 = vmatpush1.xpose.msra.mxu0 0.0
  %1478 = vmatprep.subr.mxu0 0.0
  %1479 = vmatpush1.xpose.msra.mxu0 0.0
  %1480 = vmatprep.subr.mxu0 0.0
  %1481 = vmatpush1.xpose.msra.mxu0 0.0
  %1482 = vmatprep.subr.mxu0 0.0
  %1483 = vmatpush1.xpose.msra.mxu0 0.0
  %1484 = vmatprep.subr.mxu0 0.0
  %1485 = vmatpush1.xpose.msra.mxu0 0.0
  %1486 = vmatprep.subr.mxu0 0.0
  %1487 = vmatpush1.xpose.msra.mxu0 0.0
  %1488 = vmatprep.subr.mxu0 0.0
  %1489 = vmatpush1.xpose.msra.mxu0 0.0
  %1490 = vmatprep.subr.mxu0 0.0
  %1491 = vmatpush1.xpose.msra.mxu0 0.0
  %1492 = vmatprep.mubr.f32.mxu0 0.0
  %1493 = vmatmul.mubr.f32.gmra.mrb[0].mxu0 %v1423
  %v1494 = vpop.f32.mrb[0].mxu0
  %v1495 = vadd.f32 0.0, %v1494
  %v1496 = vpop.f32.mrb[0].mxu0
  %1497 = vdwg.mxu0
  %1498 = vst.msk [vmem:[#allocation2] sm:$0xff] %vm310, %v1495
  %1499 = vxpose.xlu0.b32.start [1/16] %v1253, 128
  %1500 = vxpose.xlu0.b32.cont [2/16] 0.0, 128
  %1501 = vxpose.xlu0.b32.cont [3/16] 0.0, 128
  %1502 = vxpose.xlu0.b32.cont [4/16] 0.0, 128
  %1503 = vxpose.xlu0.b32.cont [5/16] 0.0, 128
  %1504 = vxpose.xlu0.b32.cont [6/16] 0.0, 128
  %1505 = vxpose.xlu0.b32.cont [7/16] 0.0, 128
  %1506 = vxpose.xlu0.b32.cont [8/16] 0.0, 128
  %1507 = vxpose.xlu0.b32.cont [9/16] 0.0, 128
  %1508 = vxpose.xlu0.b32.cont [10/16] 0.0, 128
  %1509 = vxpose.xlu0.b32.cont [11/16] 0.0, 128
  %1510 = vxpose.xlu0.b32.cont [12/16] 0.0, 128
  %1511 = vxpose.xlu0.b32.cont [13/16] 0.0, 128
  %1512 = vxpose.xlu0.b32.cont [14/16] 0.0, 128
  %1513 = vxpose.xlu0.b32.cont [15/16] 0.0, 128
  %1514 = vxpose.xlu0.b32.end [16/16] 0.0, 128
  %v1515 = vpop.trf.xlu0
  %v1516 = vpop.trf.xlu0
  %v1517 = vpop.trf.xlu0
  %v1518 = vpop.trf.xlu0
  %v1519 = vpop.trf.xlu0
  %v1520 = vpop.trf.xlu0
  %v1521 = vpop.trf.xlu0
  %v1522 = vpop.trf.xlu0
  %v1523 = vpop.trf.xlu0
  %v1524 = vpop.trf.xlu0
  %v1525 = vpop.trf.xlu0
  %v1526 = vpop.trf.xlu0
  %v1527 = vpop.trf.xlu0
  %v1528 = vpop.trf.xlu0
  %v1529 = vpop.trf.xlu0
  %v1530 = vpop.trf.xlu0
  %v1532 = vsel %vm310, %v1515, 0
  %1534 = vmatprep.subr.mxu0 0.0
  %1535 = vmatpush1.msra.mxu0 %v1273
  %1536 = vmatprep.subr.mxu0 0.0
  %1537 = vmatpush1.msra.mxu0 0.0
  %1538 = vmatprep.subr.mxu0 0.0
  %1539 = vmatpush1.msra.mxu0 0.0
  %1540 = vmatprep.subr.mxu0 0.0
  %1541 = vmatpush1.msra.mxu0 0.0
  %1542 = vmatprep.subr.mxu0 0.0
  %1543 = vmatpush1.msra.mxu0 0.0
  %1544 = vmatprep.subr.mxu0 0.0
  %1545 = vmatpush1.msra.mxu0 0.0
  %1546 = vmatprep.subr.mxu0 0.0
  %1547 = vmatpush1.msra.mxu0 0.0
  %1548 = vmatprep.subr.mxu0 0.0
  %1549 = vmatpush1.msra.mxu0 0.0
  %1550 = vmatprep.subr.mxu0 0.0
  %1551 = vmatpush1.msra.mxu0 0.0
  %1552 = vmatprep.subr.mxu0 0.0
  %1553 = vmatpush1.msra.mxu0 0.0
  %1554 = vmatprep.subr.mxu0 0.0
  %1555 = vmatpush1.msra.mxu0 0.0
  %1556 = vmatprep.subr.mxu0 0.0
  %1557 = vmatpush1.msra.mxu0 0.0
  %1558 = vmatprep.subr.mxu0 0.0
  %1559 = vmatpush1.msra.mxu0 0.0
  %1560 = vmatprep.subr.mxu0 0.0
  %1561 = vmatpush1.msra.mxu0 0.0
  %1562 = vmatprep.subr.mxu0 0.0
  %1563 = vmatpush1.msra.mxu0 0.0
  %1564 = vmatprep.subr.mxu0 0.0
  %1565 = vmatpush1.msra.mxu0 0.0
  %1566 = vmatprep.subr.mxu0 0.0
  %1567 = vmatpush1.msra.mxu0 0.0
  %1568 = vmatprep.subr.mxu0 0.0
  %1569 = vmatpush1.msra.mxu0 0.0
  %1570 = vmatprep.subr.mxu0 0.0
  %1571 = vmatpush1.msra.mxu0 0.0
  %1572 = vmatprep.subr.mxu0 0.0
  %1573 = vmatpush1.msra.mxu0 0.0
  %1574 = vmatprep.subr.mxu0 0.0
  %1575 = vmatpush1.msra.mxu0 0.0
  %1576 = vmatprep.subr.mxu0 0.0
  %1577 = vmatpush1.msra.mxu0 0.0
  %1578 = vmatprep.subr.mxu0 0.0
  %1579 = vmatpush1.msra.mxu0 0.0
  %1580 = vmatprep.subr.mxu0 0.0
  %1581 = vmatpush1.msra.mxu0 0.0
  %1582 = vmatprep.subr.mxu0 0.0
  %1583 = vmatpush1.msra.mxu0 0.0
  %1584 = vmatprep.subr.mxu0 0.0
  %1585 = vmatpush1.msra.mxu0 0.0
  %1586 = vmatprep.subr.mxu0 0.0
  %1587 = vmatpush1.msra.mxu0 0.0
  %1588 = vmatprep.subr.mxu0 0.0
  %1589 = vmatpush1.msra.mxu0 0.0
  %1590 = vmatprep.subr.mxu0 0.0
  %1591 = vmatpush1.msra.mxu0 0.0
  %1592 = vmatprep.subr.mxu0 0.0
  %1593 = vmatpush1.msra.mxu0 0.0
  %1594 = vmatprep.subr.mxu0 0.0
  %1595 = vmatpush1.msra.mxu0 0.0
  %1596 = vmatprep.subr.mxu0 0.0
  %1597 = vmatpush1.msra.mxu0 0.0
  %1598 = vmatprep.mubr.f32.mxu0 0.0
  %1599 = vmatmul.mubr.f32.gmra.mrb[0].mxu0 %v1532
  %v1600 = vpop.f32.mrb[0].mxu0
  %v1601 = vadd.f32 0.0, %v1600
  %v1602 = vpop.f32.mrb[0].mxu0
  %1603 = vdwg.mxu0
  %v1604 = vsel %vm310, %v1601, -inf
  %1605 = vmax.xlane.f32.xlu0 %v1604
  %v1606 = vpop.xlane.xlu0 %1605
  %v1607 = vsub.f32 %v1601, %v1606
  %v1608 = vmul.f32 %v1607, 1.442695
  %v1609 = vpow.pop %v1608
  %v1610 = vsel %vm310, %v1609, 0.0
  %1611 = vadd.xlane.f32.xlu0 %v1610
  %v1612 = vpop.xlane.xlu0 %1611
  %v1613 = vrcp.pop %v1612
  %v1614 = vmul.f32 %v1609, %v1613
  %v1616 = vsel %vm310, %v1293, 0
  %v1619 = vsel %vm310, %v1614, 0
  %1621 = vmatprep.subr.mxu0 0.0
  %1622 = vmatpush1.xpose.msra.mxu0 %v1619
  %1623 = vmatprep.subr.mxu0 0.0
  %1624 = vmatpush1.xpose.msra.mxu0 0.0
  %1625 = vmatprep.subr.mxu0 0.0
  %1626 = vmatpush1.xpose.msra.mxu0 0.0
  %1627 = vmatprep.subr.mxu0 0.0
  %1628 = vmatpush1.xpose.msra.mxu0 0.0
  %1629 = vmatprep.subr.mxu0 0.0
  %1630 = vmatpush1.xpose.msra.mxu0 0.0
  %1631 = vmatprep.subr.mxu0 0.0
  %1632 = vmatpush1.xpose.msra.mxu0 0.0
  %1633 = vmatprep.subr.mxu0 0.0
  %1634 = vmatpush1.xpose.msra.mxu0 0.0
  %1635 = vmatprep.subr.mxu0 0.0
  %1636 = vmatpush1.xpose.msra.mxu0 0.0
  %1637 = vmatprep.subr.mxu0 0.0
  %1638 = vmatpush1.xpose.msra.mxu0 0.0
  %1639 = vmatprep.subr.mxu0 0.0
  %1640 = vmatpush1.xpose.msra.mxu0 0.0
  %1641 = vmatprep.subr.mxu0 0.0
  %1642 = vmatpush1.xpose.msra.mxu0 0.0
  %1643 = vmatprep.subr.mxu0 0.0
  %1644 = vmatpush1.xpose.msra.mxu0 0.0
  %1645 = vmatprep.subr.mxu0 0.0
  %1646 = vmatpush1.xpose.msra.mxu0 0.0
  %1647 = vmatprep.subr.mxu0 0.0
  %1648 = vmatpush1.xpose.msra.mxu0 0.0
  %1649 = vmatprep.subr.mxu0 0.0
  %1650 = vmatpush1.xpose.msra.mxu0 0.0
  %1651 = vmatprep.subr.mxu0 0.0
  %1652 = vmatpush1.xpose.msra.mxu0 0.0
  %1653 = vmatprep.subr.mxu0 0.0
  %1654 = vmatpush1.xpose.msra.mxu0 0.0
  %1655 = vmatprep.subr.mxu0 0.0
  %1656 = vmatpush1.xpose.msra.mxu0 0.0
  %1657 = vmatprep.subr.mxu0 0.0
  %1658 = vmatpush1.xpose.msra.mxu0 0.0
  %1659 = vmatprep.subr.mxu0 0.0
  %1660 = vmatpush1.xpose.msra.mxu0 0.0
  %1661 = vmatprep.subr.mxu0 0.0
  %1662 = vmatpush1.xpose.msra.mxu0 0.0
  %1663 = vmatprep.subr.mxu0 0.0
  %1664 = vmatpush1.xpose.msra.mxu0 0.0
  %1665 = vmatprep.subr.mxu0 0.0
  %1666 = vmatpush1.xpose.msra.mxu0 0.0
  %1667 = vmatprep.subr.mxu0 0.0
  %1668 = vmatpush1.xpose.msra.mxu0 0.0
  %1669 = vmatprep.subr.mxu0 0.0
  %1670 = vmatpush1.xpose.msra.mxu0 0.0
  %1671 = vmatprep.subr.mxu0 0.0
  %1672 = vmatpush1.xpose.msra.mxu0 0.0
  %1673 = vmatprep.subr.mxu0 0.0
  %1674 = vmatpush1.xpose.msra.mxu0 0.0
  %1675 = vmatprep.subr.mxu0 0.0
  %1676 = vmatpush1.xpose.msra.mxu0 0.0
  %1677 = vmatprep.subr.mxu0 0.0
  %1678 = vmatpush1.xpose.msra.mxu0 0.0
  %1679 = vmatprep.subr.mxu0 0.0
  %1680 = vmatpush1.xpose.msra.mxu0 0.0
  %1681 = vmatprep.subr.mxu0 0.0
  %1682 = vmatpush1.xpose.msra.mxu0 0.0
  %1683 = vmatprep.subr.mxu0 0.0
  %1684 = vmatpush1.xpose.msra.mxu0 0.0
  %1685 = vmatprep.mubr.f32.mxu0 0.0
  %1686 = vmatmul.mubr.f32.gmra.mrb[0].mxu0 %v1616
  %v1687 = vpop.f32.mrb[0].mxu0
  %v1688 = vadd.f32 0.0, %v1687
  %v1689 = vpop.f32.mrb[0].mxu0
  %1690 = vdwg.mxu0
  %1691 = vst.msk [vmem:[#allocation2 + $0x8] sm:$0xff] %vm310, %v1688
  %1692 = vxpose.xlu0.b32.start [1/16] %v1258, 128
  %1693 = vxpose.xlu0.b32.cont [2/16] 0.0, 128
  %1694 = vxpose.xlu0.b32.cont [3/16] 0.0, 128
  %1695 = vxpose.xlu0.b32.cont [4/16] 0.0, 128
  %1696 = vxpose.xlu0.b32.cont [5/16] 0.0, 128
  %1697 = vxpose.xlu0.b32.cont [6/16] 0.0, 128
  %1698 = vxpose.xlu0.b32.cont [7/16] 0.0, 128
  %1699 = vxpose.xlu0.b32.cont [8/16] 0.0, 128
  %1700 = vxpose.xlu0.b32.cont [9/16] 0.0, 128
  %1701 = vxpose.xlu0.b32.cont [10/16] 0.0, 128
  %1702 = vxpose.xlu0.b32.cont [11/16] 0.0, 128
  %1703 = vxpose.xlu0.b32.cont [12/16] 0.0, 128
  %1704 = vxpose.xlu0.b32.cont [13/16] 0.0, 128
  %1705 = vxpose.xlu0.b32.cont [14/16] 0.0, 128
  %1706 = vxpose.xlu0.b32.cont [15/16] 0.0, 128
  %1707 = vxpose.xlu0.b32.end [16/16] 0.0, 128
  %v1708 = vpop.trf.xlu0
  %v1709 = vpop.trf.xlu0
  %v1710 = vpop.trf.xlu0
  %v1711 = vpop.trf.xlu0
  %v1712 = vpop.trf.xlu0
  %v1713 = vpop.trf.xlu0
  %v1714 = vpop.trf.xlu0
  %v1715 = vpop.trf.xlu0
  %v1716 = vpop.trf.xlu0
  %v1717 = vpop.trf.xlu0
  %v1718 = vpop.trf.xlu0
  %v1719 = vpop.trf.xlu0
  %v1720 = vpop.trf.xlu0
  %v1721 = vpop.trf.xlu0
  %v1722 = vpop.trf.xlu0
  %v1723 = vpop.trf.xlu0
  %v1725 = vsel %vm310, %v1708, 0
  %1727 = vmatprep.subr.mxu0 0.0
  %1728 = vmatpush1.msra.mxu0 %v1278
  %1729 = vmatprep.subr.mxu0 0.0
  %1730 = vmatpush1.msra.mxu0 0.0
  %1731 = vmatprep.subr.mxu0 0.0
  %1732 = vmatpush1.msra.mxu0 0.0
  %1733 = vmatprep.subr.mxu0 0.0
  %1734 = vmatpush1.msra.mxu0 0.0
  %1735 = vmatprep.subr.mxu0 0.0
  %1736 = vmatpush1.msra.mxu0 0.0
  %1737 = vmatprep.subr.mxu0 0.0
  %1738 = vmatpush1.msra.mxu0 0.0
  %1739 = vmatprep.subr.mxu0 0.0
  %1740 = vmatpush1.msra.mxu0 0.0
  %1741 = vmatprep.subr.mxu0 0.0
  %1742 = vmatpush1.msra.mxu0 0.0
  %1743 = vmatprep.subr.mxu0 0.0
  %1744 = vmatpush1.msra.mxu0 0.0
  %1745 = vmatprep.subr.mxu0 0.0
  %1746 = vmatpush1.msra.mxu0 0.0
  %1747 = vmatprep.subr.mxu0 0.0
  %1748 = vmatpush1.msra.mxu0 0.0
  %1749 = vmatprep.subr.mxu0 0.0
  %1750 = vmatpush1.msra.mxu0 0.0
  %1751 = vmatprep.subr.mxu0 0.0
  %1752 = vmatpush1.msra.mxu0 0.0
  %1753 = vmatprep.subr.mxu0 0.0
  %1754 = vmatpush1.msra.mxu0 0.0
  %1755 = vmatprep.subr.mxu0 0.0
  %1756 = vmatpush1.msra.mxu0 0.0
  %1757 = vmatprep.subr.mxu0 0.0
  %1758 = vmatpush1.msra.mxu0 0.0
  %1759 = vmatprep.subr.mxu0 0.0
  %1760 = vmatpush1.msra.mxu0 0.0
  %1761 = vmatprep.subr.mxu0 0.0
  %1762 = vmatpush1.msra.mxu0 0.0
  %1763 = vmatprep.subr.mxu0 0.0
  %1764 = vmatpush1.msra.mxu0 0.0
  %1765 = vmatprep.subr.mxu0 0.0
  %1766 = vmatpush1.msra.mxu0 0.0
  %1767 = vmatprep.subr.mxu0 0.0
  %1768 = vmatpush1.msra.mxu0 0.0
  %1769 = vmatprep.subr.mxu0 0.0
  %1770 = vmatpush1.msra.mxu0 0.0
  %1771 = vmatprep.subr.mxu0 0.0
  %1772 = vmatpush1.msra.mxu0 0.0
  %1773 = vmatprep.subr.mxu0 0.0
  %1774 = vmatpush1.msra.mxu0 0.0
  %1775 = vmatprep.subr.mxu0 0.0
  %1776 = vmatpush1.msra.mxu0 0.0
  %1777 = vmatprep.subr.mxu0 0.0
  %1778 = vmatpush1.msra.mxu0 0.0
  %1779 = vmatprep.subr.mxu0 0.0
  %1780 = vmatpush1.msra.mxu0 0.0
  %1781 = vmatprep.subr.mxu0 0.0
  %1782 = vmatpush1.msra.mxu0 0.0
  %1783 = vmatprep.subr.mxu0 0.0
  %1784 = vmatpush1.msra.mxu0 0.0
  %1785 = vmatprep.subr.mxu0 0.0
  %1786 = vmatpush1.msra.mxu0 0.0
  %1787 = vmatprep.subr.mxu0 0.0
  %1788 = vmatpush1.msra.mxu0 0.0
  %1789 = vmatprep.subr.mxu0 0.0
  %1790 = vmatpush1.msra.mxu0 0.0
  %1791 = vmatprep.mubr.f32.mxu0 0.0
  %1792 = vmatmul.mubr.f32.gmra.mrb[0].mxu0 %v1725
  %v1793 = vpop.f32.mrb[0].mxu0
  %v1794 = vadd.f32 0.0, %v1793
  %v1795 = vpop.f32.mrb[0].mxu0
  %1796 = vdwg.mxu0
  %v1797 = vsel %vm310, %v1794, -inf
  %1798 = vmax.xlane.f32.xlu0 %v1797
  %v1799 = vpop.xlane.xlu0 %1798
  %v1800 = vsub.f32 %v1794, %v1799
  %v1801 = vmul.f32 %v1800, 1.442695
  %v1802 = vpow.pop %v1801
  %v1803 = vsel %vm310, %v1802, 0.0
  %1804 = vadd.xlane.f32.xlu0 %v1803
  %v1805 = vpop.xlane.xlu0 %1804
  %v1806 = vrcp.pop %v1805
  %v1807 = vmul.f32 %v1802, %v1806
  %v1809 = vsel %vm310, %v1298, 0
  %v1812 = vsel %vm310, %v1807, 0
  %1814 = vmatprep.subr.mxu0 0.0
  %1815 = vmatpush1.xpose.msra.mxu0 %v1812
  %1816 = vmatprep.subr.mxu0 0.0
  %1817 = vmatpush1.xpose.msra.mxu0 0.0
  %1818 = vmatprep.subr.mxu0 0.0
  %1819 = vmatpush1.xpose.msra.mxu0 0.0
  %1820 = vmatprep.subr.mxu0 0.0
  %1821 = vmatpush1.xpose.msra.mxu0 0.0
  %1822 = vmatprep.subr.mxu0 0.0
  %1823 = vmatpush1.xpose.msra.mxu0 0.0
  %1824 = vmatprep.subr.mxu0 0.0
  %1825 = vmatpush1.xpose.msra.mxu0 0.0
  %1826 = vmatprep.subr.mxu0 0.0
  %1827 = vmatpush1.xpose.msra.mxu0 0.0
  %1828 = vmatprep.subr.mxu0 0.0
  %1829 = vmatpush1.xpose.msra.mxu0 0.0
  %1830 = vmatprep.subr.mxu0 0.0
  %1831 = vmatpush1.xpose.msra.mxu0 0.0
  %1832 = vmatprep.subr.mxu0 0.0
  %1833 = vmatpush1.xpose.msra.mxu0 0.0
  %1834 = vmatprep.subr.mxu0 0.0
  %1835 = vmatpush1.xpose.msra.mxu0 0.0
  %1836 = vmatprep.subr.mxu0 0.0
  %1837 = vmatpush1.xpose.msra.mxu0 0.0
  %1838 = vmatprep.subr.mxu0 0.0
  %1839 = vmatpush1.xpose.msra.mxu0 0.0
  %1840 = vmatprep.subr.mxu0 0.0
  %1841 = vmatpush1.xpose.msra.mxu0 0.0
  %1842 = vmatprep.subr.mxu0 0.0
  %1843 = vmatpush1.xpose.msra.mxu0 0.0
  %1844 = vmatprep.subr.mxu0 0.0
  %1845 = vmatpush1.xpose.msra.mxu0 0.0
  %1846 = vmatprep.subr.mxu0 0.0
  %1847 = vmatpush1.xpose.msra.mxu0 0.0
  %1848 = vmatprep.subr.mxu0 0.0
  %1849 = vmatpush1.xpose.msra.mxu0 0.0
  %1850 = vmatprep.subr.mxu0 0.0
  %1851 = vmatpush1.xpose.msra.mxu0 0.0
  %1852 = vmatprep.subr.mxu0 0.0
  %1853 = vmatpush1.xpose.msra.mxu0 0.0
  %1854 = vmatprep.subr.mxu0 0.0
  %1855 = vmatpush1.xpose.msra.mxu0 0.0
  %1856 = vmatprep.subr.mxu0 0.0
  %1857 = vmatpush1.xpose.msra.mxu0 0.0
  %1858 = vmatprep.subr.mxu0 0.0
  %1859 = vmatpush1.xpose.msra.mxu0 0.0
  %1860 = vmatprep.subr.mxu0 0.0
  %1861 = vmatpush1.xpose.msra.mxu0 0.0
  %1862 = vmatprep.subr.mxu0 0.0
  %1863 = vmatpush1.xpose.msra.mxu0 0.0
  %1864 = vmatprep.subr.mxu0 0.0
  %1865 = vmatpush1.xpose.msra.mxu0 0.0
  %1866 = vmatprep.subr.mxu0 0.0
  %1867 = vmatpush1.xpose.msra.mxu0 0.0
  %1868 = vmatprep.subr.mxu0 0.0
  %1869 = vmatpush1.xpose.msra.mxu0 0.0
  %1870 = vmatprep.subr.mxu0 0.0
  %1871 = vmatpush1.xpose.msra.mxu0 0.0
  %1872 = vmatprep.subr.mxu0 0.0
  %1873 = vmatpush1.xpose.msra.mxu0 0.0
  %1874 = vmatprep.subr.mxu0 0.0
  %1875 = vmatpush1.xpose.msra.mxu0 0.0
  %1876 = vmatprep.subr.mxu0 0.0
  %1877 = vmatpush1.xpose.msra.mxu0 0.0
  %1878 = vmatprep.mubr.f32.mxu0 0.0
  %1879 = vmatmul.mubr.f32.gmra.mrb[0].mxu0 %v1809
  %v1880 = vpop.f32.mrb[0].mxu0
  %v1881 = vadd.f32 0.0, %v1880
  %v1882 = vpop.f32.mrb[0].mxu0
  %1883 = vdwg.mxu0
  %1884 = vst.msk [vmem:[#allocation2 + $0x10] sm:$0xff] %vm310, %v1881
  %1885 = vxpose.xlu0.b32.start [1/16] %v1263, 128
  %1886 = vxpose.xlu0.b32.cont [2/16] 0.0, 128
  %1887 = vxpose.xlu0.b32.cont [3/16] 0.0, 128
  %1888 = vxpose.xlu0.b32.cont [4/16] 0.0, 128
  %1889 = vxpose.xlu0.b32.cont [5/16] 0.0, 128
  %1890 = vxpose.xlu0.b32.cont [6/16] 0.0, 128
  %1891 = vxpose.xlu0.b32.cont [7/16] 0.0, 128
  %1892 = vxpose.xlu0.b32.cont [8/16] 0.0, 128
  %1893 = vxpose.xlu0.b32.cont [9/16] 0.0, 128
  %1894 = vxpose.xlu0.b32.cont [10/16] 0.0, 128
  %1895 = vxpose.xlu0.b32.cont [11/16] 0.0, 128
  %1896 = vxpose.xlu0.b32.cont [12/16] 0.0, 128
  %1897 = vxpose.xlu0.b32.cont [13/16] 0.0, 128
  %1898 = vxpose.xlu0.b32.cont [14/16] 0.0, 128
  %1899 = vxpose.xlu0.b32.cont [15/16] 0.0, 128
  %1900 = vxpose.xlu0.b32.end [16/16] 0.0, 128
  %v1901 = vpop.trf.xlu0
  %v1902 = vpop.trf.xlu0
  %v1903 = vpop.trf.xlu0
  %v1904 = vpop.trf.xlu0
  %v1905 = vpop.trf.xlu0
  %v1906 = vpop.trf.xlu0
  %v1907 = vpop.trf.xlu0
  %v1908 = vpop.trf.xlu0
  %v1909 = vpop.trf.xlu0
  %v1910 = vpop.trf.xlu0
  %v1911 = vpop.trf.xlu0
  %v1912 = vpop.trf.xlu0
  %v1913 = vpop.trf.xlu0
  %v1914 = vpop.trf.xlu0
  %v1915 = vpop.trf.xlu0
  %v1916 = vpop.trf.xlu0
  %v1918 = vsel %vm310, %v1901, 0
  %1920 = vmatprep.subr.mxu0 0.0
  %1921 = vmatpush1.msra.mxu0 %v1283
  %1922 = vmatprep.subr.mxu0 0.0
  %1923 = vmatpush1.msra.mxu0 0.0
  %1924 = vmatprep.subr.mxu0 0.0
  %1925 = vmatpush1.msra.mxu0 0.0
  %1926 = vmatprep.subr.mxu0 0.0
  %1927 = vmatpush1.msra.mxu0 0.0
  %1928 = vmatprep.subr.mxu0 0.0
  %1929 = vmatpush1.msra.mxu0 0.0
  %1930 = vmatprep.subr.mxu0 0.0
  %1931 = vmatpush1.msra.mxu0 0.0
  %1932 = vmatprep.subr.mxu0 0.0
  %1933 = vmatpush1.msra.mxu0 0.0
  %1934 = vmatprep.subr.mxu0 0.0
  %1935 = vmatpush1.msra.mxu0 0.0
  %1936 = vmatprep.subr.mxu0 0.0
  %1937 = vmatpush1.msra.mxu0 0.0
  %1938 = vmatprep.subr.mxu0 0.0
  %1939 = vmatpush1.msra.mxu0 0.0
  %1940 = vmatprep.subr.mxu0 0.0
  %1941 = vmatpush1.msra.mxu0 0.0
  %1942 = vmatprep.subr.mxu0 0.0
  %1943 = vmatpush1.msra.mxu0 0.0
  %1944 = vmatprep.subr.mxu0 0.0
  %1945 = vmatpush1.msra.mxu0 0.0
  %1946 = vmatprep.subr.mxu0 0.0
  %1947 = vmatpush1.msra.mxu0 0.0
  %1948 = vmatprep.subr.mxu0 0.0
  %1949 = vmatpush1.msra.mxu0 0.0
  %1950 = vmatprep.subr.mxu0 0.0
  %1951 = vmatpush1.msra.mxu0 0.0
  %1952 = vmatprep.subr.mxu0 0.0
  %1953 = vmatpush1.msra.mxu0 0.0
  %1954 = vmatprep.subr.mxu0 0.0
  %1955 = vmatpush1.msra.mxu0 0.0
  %1956 = vmatprep.subr.mxu0 0.0
  %1957 = vmatpush1.msra.mxu0 0.0
  %1958 = vmatprep.subr.mxu0 0.0
  %1959 = vmatpush1.msra.mxu0 0.0
  %1960 = vmatprep.subr.mxu0 0.0
  %1961 = vmatpush1.msra.mxu0 0.0
  %1962 = vmatprep.subr.mxu0 0.0
  %1963 = vmatpush1.msra.mxu0 0.0
  %1964 = vmatprep.subr.mxu0 0.0
  %1965 = vmatpush1.msra.mxu0 0.0
  %1966 = vmatprep.subr.mxu0 0.0
  %1967 = vmatpush1.msra.mxu0 0.0
  %1968 = vmatprep.subr.mxu0 0.0
  %1969 = vmatpush1.msra.mxu0 0.0
  %1970 = vmatprep.subr.mxu0 0.0
  %1971 = vmatpush1.msra.mxu0 0.0
  %1972 = vmatprep.subr.mxu0 0.0
  %1973 = vmatpush1.msra.mxu0 0.0
  %1974 = vmatprep.subr.mxu0 0.0
  %1975 = vmatpush1.msra.mxu0 0.0
  %1976 = vmatprep.subr.mxu0 0.0
  %1977 = vmatpush1.msra.mxu0 0.0
  %1978 = vmatprep.subr.mxu0 0.0
  %1979 = vmatpush1.msra.mxu0 0.0
  %1980 = vmatprep.subr.mxu0 0.0
  %1981 = vmatpush1.msra.mxu0 0.0
  %1982 = vmatprep.subr.mxu0 0.0
  %1983 = vmatpush1.msra.mxu0 0.0
  %1984 = vmatprep.mubr.f32.mxu0 0.0
  %1985 = vmatmul.mubr.f32.gmra.mrb[0].mxu0 %v1918
  %v1986 = vpop.f32.mrb[0].mxu0
  %v1987 = vadd.f32 0.0, %v1986
  %v1988 = vpop.f32.mrb[0].mxu0
  %1989 = vdwg.mxu0
  %v1990 = vsel %vm310, %v1987, -inf
  %1991 = vmax.xlane.f32.xlu0 %v1990
  %v1992 = vpop.xlane.xlu0 %1991
  %v1993 = vsub.f32 %v1987, %v1992
  %v1994 = vmul.f32 %v1993, 1.442695
  %v1995 = vpow.pop %v1994
  %v1996 = vsel %vm310, %v1995, 0.0
  %1997 = vadd.xlane.f32.xlu0 %v1996
  %v1998 = vpop.xlane.xlu0 %1997
  %v1999 = vrcp.pop %v1998
  %v2000 = vmul.f32 %v1995, %v1999
  %v2002 = vsel %vm310, %v1303, 0
  %v2005 = vsel %vm310, %v2000, 0
  %2007 = vmatprep.subr.mxu0 0.0
  %2008 = vmatpush1.xpose.msra.mxu0 %v2005
  %2009 = vmatprep.subr.mxu0 0.0
  %2010 = vmatpush1.xpose.msra.mxu0 0.0
  %2011 = vmatprep.subr.mxu0 0.0
  %2012 = vmatpush1.xpose.msra.mxu0 0.0
  %2013 = vmatprep.subr.mxu0 0.0
  %2014 = vmatpush1.xpose.msra.mxu0 0.0
  %2015 = vmatprep.subr.mxu0 0.0
  %2016 = vmatpush1.xpose.msra.mxu0 0.0
  %2017 = vmatprep.subr.mxu0 0.0
  %2018 = vmatpush1.xpose.msra.mxu0 0.0
  %2019 = vmatprep.subr.mxu0 0.0
  %2020 = vmatpush1.xpose.msra.mxu0 0.0
  %2021 = vmatprep.subr.mxu0 0.0
  %2022 = vmatpush1.xpose.msra.mxu0 0.0
  %2023 = vmatprep.subr.mxu0 0.0
  %2024 = vmatpush1.xpose.msra.mxu0 0.0
  %2025 = vmatprep.subr.mxu0 0.0
  %2026 = vmatpush1.xpose.msra.mxu0 0.0
  %2027 = vmatprep.subr.mxu0 0.0
  %2028 = vmatpush1.xpose.msra.mxu0 0.0
  %2029 = vmatprep.subr.mxu0 0.0
  %2030 = vmatpush1.xpose.msra.mxu0 0.0
  %2031 = vmatprep.subr.mxu0 0.0
  %2032 = vmatpush1.xpose.msra.mxu0 0.0
  %2033 = vmatprep.subr.mxu0 0.0
  %2034 = vmatpush1.xpose.msra.mxu0 0.0
  %2035 = vmatprep.subr.mxu0 0.0
  %2036 = vmatpush1.xpose.msra.mxu0 0.0
  %2037 = vmatprep.subr.mxu0 0.0
  %2038 = vmatpush1.xpose.msra.mxu0 0.0
  %2039 = vmatprep.subr.mxu0 0.0
  %2040 = vmatpush1.xpose.msra.mxu0 0.0
  %2041 = vmatprep.subr.mxu0 0.0
  %2042 = vmatpush1.xpose.msra.mxu0 0.0
  %2043 = vmatprep.subr.mxu0 0.0
  %2044 = vmatpush1.xpose.msra.mxu0 0.0
  %2045 = vmatprep.subr.mxu0 0.0
  %2046 = vmatpush1.xpose.msra.mxu0 0.0
  %2047 = vmatprep.subr.mxu0 0.0
  %2048 = vmatpush1.xpose.msra.mxu0 0.0
  %2049 = vmatprep.subr.mxu0 0.0
  %2050 = vmatpush1.xpose.msra.mxu0 0.0
  %2051 = vmatprep.subr.mxu0 0.0
  %2052 = vmatpush1.xpose.msra.mxu0 0.0
  %2053 = vmatprep.subr.mxu0 0.0
  %2054 = vmatpush1.xpose.msra.mxu0 0.0
  %2055 = vmatprep.subr.mxu0 0.0
  %2056 = vmatpush1.xpose.msra.mxu0 0.0
  %2057 = vmatprep.subr.mxu0 0.0
  %2058 = vmatpush1.xpose.msra.mxu0 0.0
  %2059 = vmatprep.subr.mxu0 0.0
  %2060 = vmatpush1.xpose.msra.mxu0 0.0
  %2061 = vmatprep.subr.mxu0 0.0
  %2062 = vmatpush1.xpose.msra.mxu0 0.0
  %2063 = vmatprep.subr.mxu0 0.0
  %2064 = vmatpush1.xpose.msra.mxu0 0.0
  %2065 = vmatprep.subr.mxu0 0.0
  %2066 = vmatpush1.xpose.msra.mxu0 0.0
  %2067 = vmatprep.subr.mxu0 0.0
  %2068 = vmatpush1.xpose.msra.mxu0 0.0
  %2069 = vmatprep.subr.mxu0 0.0
  %2070 = vmatpush1.xpose.msra.mxu0 0.0
  %2071 = vmatprep.mubr.f32.mxu0 0.0
  %2072 = vmatmul.mubr.f32.gmra.mrb[0].mxu0 %v2002
  %v2073 = vpop.f32.mrb[0].mxu0
  %v2074 = vadd.f32 0.0, %v2073
  %v2075 = vpop.f32.mrb[0].mxu0
  %2076 = vdwg.mxu0
  %2077 = vst.msk [vmem:[#allocation2 + $0x18] sm:$0xff] %vm310, %v2074
  %v2078 = vld [vmem:[#allocation2] sm:$0xff]
  %v2079 = vld [vmem:[#allocation2 + $0x8] sm:$0xff]
  %v2080 = vld [vmem:[#allocation2 + $0x10] sm:$0xff]
  %v2081 = vld [vmem:[#allocation2 + $0x18] sm:$0xff]
  %2082 = vmatprep.subr.mxu0 0.0
  %2083 = vmatpush1.msra.mxu0 %v2078
  %2084 = vmatprep.subr.mxu0 0.0
  %2085 = vmatpush1.msra.mxu0 %v2079
  %2086 = vmatprep.subr.mxu0 0.0
  %2087 = vmatpush1.msra.mxu0 %v2080
  %2088 = vmatprep.subr.mxu0 0.0
  %2089 = vmatpush1.msra.mxu0 %v2081
  %2090 = vmatprep.subr.mxu0 0.0
  %2091 = vmatpush1.msra.mxu0 0.0
  %2092 = vmatprep.subr.mxu0 0.0
  %2093 = vmatpush1.msra.mxu0 0.0
  %2094 = vmatprep.subr.mxu0 0.0
  %2095 = vmatpush1.msra.mxu0 0.0
  %2096 = vmatprep.subr.mxu0 0.0
  %2097 = vmatpush1.msra.mxu0 0.0
  %2098 = vmatprep.subr.mxu0 0.0
  %2099 = vmatpush1.msra.mxu0 0.0
  %2100 = vmatprep.subr.mxu0 0.0
  %2101 = vmatpush1.msra.mxu0 0.0
  %2102 = vmatprep.subr.mxu0 0.0
  %2103 = vmatpush1.msra.mxu0 0.0
  %2104 = vmatprep.subr.mxu0 0.0
  %2105 = vmatpush1.msra.mxu0 0.0
  %2106 = vmatprep.subr.mxu0 0.0
  %2107 = vmatpush1.msra.mxu0 0.0
  %2108 = vmatprep.subr.mxu0 0.0
  %2109 = vmatpush1.msra.mxu0 0.0
  %2110 = vmatprep.subr.mxu0 0.0
  %2111 = vmatpush1.msra.mxu0 0.0
  %2112 = vmatprep.subr.mxu0 0.0
  %2113 = vmatpush1.msra.mxu0 0.0
  %2114 = vmatprep.subr.mxu0 0.0
  %2115 = vmatpush1.msra.mxu0 0.0
  %2116 = vmatprep.subr.mxu0 0.0
  %2117 = vmatpush1.msra.mxu0 0.0
  %2118 = vmatprep.subr.mxu0 0.0
  %2119 = vmatpush1.msra.mxu0 0.0
  %2120 = vmatprep.subr.mxu0 0.0
  %2121 = vmatpush1.msra.mxu0 0.0
  %2122 = vmatprep.subr.mxu0 0.0
  %2123 = vmatpush1.msra.mxu0 0.0
  %2124 = vmatprep.subr.mxu0 0.0
  %2125 = vmatpush1.msra.mxu0 0.0
  %2126 = vmatprep.subr.mxu0 0.0
  %2127 = vmatpush1.msra.mxu0 0.0
  %2128 = vmatprep.subr.mxu0 0.0
  %2129 = vmatpush1.msra.mxu0 0.0
  %2130 = vmatprep.subr.mxu0 0.0
  %2131 = vmatpush1.msra.mxu0 0.0
  %2132 = vmatprep.subr.mxu0 0.0
  %2133 = vmatpush1.msra.mxu0 0.0
  %2134 = vmatprep.subr.mxu0 0.0
  %2135 = vmatpush1.msra.mxu0 0.0
  %2136 = vmatprep.subr.mxu0 0.0
  %2137 = vmatpush1.msra.mxu0 0.0
  %2138 = vmatprep.subr.mxu0 0.0
  %2139 = vmatpush1.msra.mxu0 0.0
  %2140 = vmatprep.subr.mxu0 0.0
  %2141 = vmatpush1.msra.mxu0 0.0
  %2142 = vmatprep.subr.mxu0 0.0
  %2143 = vmatpush1.msra.mxu0 0.0
  %2144 = vmatprep.subr.mxu0 0.0
  %2145 = vmatpush1.msra.mxu0 0.0
  %2146 = vmatprep.mubr.f32.mxu0 0.0
  %2147 = vmatmul.mubr.f32.gmra.mrb[0].mxu0 %v1076
  %v2148 = vpop.f32.mrb[0].mxu0
  %v2149 = vadd.f32 %v1058, %v2148
  %v2150 = vpop.f32.mrb[0].mxu0
  %2151 = vmatprep.mubr.f32.mxu0 0.0
  %2152 = vmatmul.mubr.f32.gmra.mrb[0].mxu0 %v1079
  %v2153 = vpop.f32.mrb[0].mxu0
  %v2154 = vadd.f32 %v1063, %v2153
  %v2155 = vpop.f32.mrb[0].mxu0
  %2156 = vmatprep.mubr.f32.mxu0 0.0
  %2157 = vmatmul.mubr.f32.gmra.mrb[0].mxu0 %v1082
  %v2158 = vpop.f32.mrb[0].mxu0
  %v2159 = vadd.f32 %v1068, %v2158
  %v2160 = vpop.f32.mrb[0].mxu0
  %2161 = vmatprep.mubr.f32.mxu0 0.0
  %2162 = vmatmul.mubr.f32.gmra.mrb[0].mxu0 %v1085
  %v2163 = vpop.f32.mrb[0].mxu0
  %v2164 = vadd.f32 %v1073, %v2163
  %v2165 = vpop.f32.mrb[0].mxu0
  %2166 = vdwg.mxu0
  %s2167 = scalar_lea.vmem %s5, 32
  %2168 = vst.msk [vmem:[%s2167] sm:$0xff] %vm310, %v2149
  %2169 = vst.msk [vmem:[%s2167 + $0x8] sm:$0xff] %vm310, %v2154
  %2170 = vst.msk [vmem:[%s2167 + $0x10] sm:$0xff] %vm310, %v2159
  %2171 = vst.msk [vmem:[%s2167 + $0x18] sm:$0xff] %vm310, %v2164
  // Predicated region
  $region22: #{tpu_custom_call.1} parent=0 // pred_check
    _
  $region23: #{tpu_custom_call.1} parent=0 // pred_check_branch
    %2173 = sbr.rel (0) target = $region25
  $region24: #{tpu_custom_call.1} parent=0 // pred_region
    _
  $region25: #{tpu_custom_call.1} parent=0 // pred_fallthru
    _
  // Predicated region
  $region26: #{tpu_custom_call.1} parent=0 // pred_check
    _
  $region27: #{tpu_custom_call.1} parent=0 // pred_check_branch
    %2175 = sbr.rel (0) target = $region29
  $region28: #{tpu_custom_call.1} parent=0 // pred_region
    _
  $region29: #{tpu_custom_call.1} parent=0 // pred_fallthru
    _

</llo_original>
